<compile_context>
chip_gen: v6e
topology: v6e:2x2x1
jax: 0.10.0
libtpu: 0.0.40
codegen_flags: <defaults>
</compile_context>

<pallas_src>
import functools

import jax
import jax.numpy as jnp
from jax.experimental import pallas as pl
from jax.experimental.pallas import tpu as pltpu


def _fcn2_fused_kernel(w2_ref, w1_ref, x_ref, o_ref):
    # Collapse the two bias-free linear layers: V = W2 @ W1, shape (1, d).
    # W1/W2 blocks are grid-invariant (fetched once); recomputing V per step
    # is ~4 Kflop at these sizes and keeps the kernel megacore-safe.
    v = jnp.dot(w2_ref[...], w1_ref[...], preferred_element_type=jnp.float32)
    # out[t, 0] = sum_l X[t, l] * V[0, l].  LHS (the big X tile) keeps its
    # contraction dim on lanes -> no per-step XLU transpose of X; only the
    # tiny (1, d) V gets re-laid-out for the MXU.
    o_ref[...] = jax.lax.dot_general(
        x_ref[...],
        v,
        dimension_numbers=(((1,), (1,)), ((), ())),
        preferred_element_type=jnp.float32,
    ).astype(o_ref.dtype)


def _choose_tile_p(P, tile_p_max=2048, min_steps=2):
    """Large tiles to amortize the ~0.35us/step pipeline overhead of this
    HBM-bound kernel, but keep >= min_steps grid steps (when P is big enough)
    so v7x's two TensorCores both receive work."""
    tile = min(tile_p_max, max(128, pl.cdiv(P, min_steps)))
    return ((tile + 127) // 128) * 128  # lane/sublane aligned


@functools.partial(jax.jit, static_argnames=("tile_p",))
def fcn_2_layers_forward(X, W1, W2, tile_p=None):
    """Pallas equivalent of FCN_2_layers.forward (identity activation)."""
    P, d = X.shape
    N, d1 = W1.shape
    assert d1 == d and W2.shape == (1, N)
    if tile_p is None:
        tile_p = _choose_tile_p(P)

    return pl.pallas_call(
        _fcn2_fused_kernel,
        out_shape=jax.ShapeDtypeStruct((P, 1), jnp.float32),
        grid=(pl.cdiv(P, tile_p),),  # ragged tail handled by Pallas, no jnp.pad
        in_specs=[
            pl.BlockSpec((1, N), lambda i: (0, 0)),       # W2: grid-invariant
            pl.BlockSpec((N, d), lambda i: (0, 0)),       # W1: grid-invariant
            pl.BlockSpec((tile_p, d), lambda i: (i, 0)),  # X sample tile
        ],
        out_specs=pl.BlockSpec((tile_p, 1), lambda i: (i, 0)),
        compiler_params=pltpu.CompilerParams(
            # Splits P across v7x's two TensorCores; harmless on v5e/v6e.
            dimension_semantics=("parallel",),
        ),
    )(W2, W1, X)


if __name__ == "__main__":
    # Small shapes consistent with the module: d input features, N hidden
    # units, P samples batched into one call.  P is deliberately NOT a
    # multiple of the tile size so the pad-free ragged-tail path is exercised
    # (tile_p is chosen as 2048 -> 2 grid steps, second one partial).
    d, N, P = 32, 64, 4000
    init_hidden, init_out = 1.0 / d, 1.0 / N

    key = jax.random.PRNGKey(0)
    k1, k2, kx = jax.random.split(key, 3)

    # lin1.weight ~ N(0, init_hidden), shape (N, d);
    # lin2.weight ~ N(0, init_out),    shape (1, N).
    W1 = jax.random.normal(k1, (N, d), dtype=jnp.float32) * (init_hidden ** 0.5)
    W2 = jax.random.normal(k2, (1, N), dtype=jnp.float32) * (init_out ** 0.5)
    X = jax.random.normal(kx, (P, d), dtype=jnp.float32)

    out = jax.block_until_ready(fcn_2_layers_forward(X, W1, W2))

    # Reference: lin2(lin1(X)) with no biases and identity activation.
    hidden = jnp.einsum("pd,nd->pn", X, W1, precision=jax.lax.Precision.HIGHEST)
    ref = jnp.einsum("pn,kn->pk", hidden, W2, precision=jax.lax.Precision.HIGHEST)

    assert out.shape == (P, 1)
    max_err = float(jnp.max(jnp.abs(out - ref)))
    assert jnp.allclose(out, ref, atol=2e-4, rtol=2e-4), max_err

    print("KERNEL_OK")
</pallas_src>

<mosaic_0001>
module attributes {stable_mosaic.version = 11 : i64} {
  func.func @_fcn2_fused_kernel(%arg0: i32, %arg1: memref<1x64xf32, #tpu.memory_space<vmem>>, %arg2: memref<64x32xf32, #tpu.memory_space<vmem>>, %arg3: memref<2048x32xf32, #tpu.memory_space<vmem>>, %arg4: memref<2048x1xf32, #tpu.memory_space<vmem>>) attributes {dimension_semantics = [#tpu.dimension_semantics<parallel>], iteration_bounds = array<i64: 2>, scalar_prefetch = 0 : i64, scratch_operands = 0 : i64, tpu.core_type = #tpu.core_type<tc>, window_params = [{pipeline_mode = #tpu.pipeline_mode<synchronous>, transform_indices = @transform_0, window_bounds = array<i64: 1, 64>}, {pipeline_mode = #tpu.pipeline_mode<synchronous>, transform_indices = @transform_1, window_bounds = array<i64: 64, 32>}, {transform_indices = @transform_2, window_bounds = array<i64: 2048, 32>}, {transform_indices = @transform_3, window_bounds = array<i64: 2048, 1>}]} {
    %c0 = arith.constant 0 : index
    %c0_0 = arith.constant 0 : index
    %0 = vector.load %arg1[%c0, %c0_0] : memref<1x64xf32, #tpu.memory_space<vmem>>, vector<1x64xf32>
    %c0_1 = arith.constant 0 : index
    %c0_2 = arith.constant 0 : index
    %1 = vector.load %arg2[%c0_1, %c0_2] : memref<64x32xf32, #tpu.memory_space<vmem>>, vector<64x32xf32>
    %cst = arith.constant dense<0.000000e+00> : vector<1x32xf32>
    %2 = tpu.matmul %0, %1, %cst {dimension_numbers = #tpu.dot_dimension_numbers<[1], [0], [0], [1], [0, 0, 1, 1], [], []>} : vector<1x64xf32>, vector<64x32xf32>, vector<1x32xf32> -> vector<1x32xf32>
    %c0_3 = arith.constant 0 : index
    %c0_4 = arith.constant 0 : index
    %3 = vector.load %arg3[%c0_3, %c0_4] : memref<2048x32xf32, #tpu.memory_space<vmem>>, vector<2048x32xf32>
    %cst_5 = arith.constant dense<0.000000e+00> : vector<2048x1xf32>
    %4 = tpu.matmul %3, %2, %cst_5 {dimension_numbers = #tpu.dot_dimension_numbers<[1], [1], [0], [0], [0, 0, 1, 0], [], []>} : vector<2048x32xf32>, vector<1x32xf32>, vector<2048x1xf32> -> vector<2048x1xf32>
    %c0_6 = arith.constant 0 : index
    %c0_7 = arith.constant 0 : index
    %5 = vector.load %arg4[%c0_6, %c0_7] : memref<2048x1xf32, #tpu.memory_space<vmem>>, vector<2048x1xf32>
    tpu.vector_store %arg4[%c0_6, %c0_7], %4 {strides = array<i32>} : memref<2048x1xf32, #tpu.memory_space<vmem>>, vector<2048x1xf32>,
    return
  }
  func.func @transform_0(%arg0: i32) -> (i32, i32) {
    %c0_i32 = arith.constant 0 : i32
    %c0_i32_0 = arith.constant 0 : i32
    %c0_i32_1 = arith.constant 0 : i32
    return %c0_i32, %c0_i32_0 : i32, i32
  }
  func.func @transform_1(%arg0: i32) -> (i32, i32) {
    %c0_i32 = arith.constant 0 : i32
    %c0_i32_0 = arith.constant 0 : i32
    %c0_i32_1 = arith.constant 0 : i32
    return %c0_i32, %c0_i32_0 : i32, i32
  }
  func.func @transform_2(%arg0: i32) -> (i32, i32) {
    %c0_i32 = arith.constant 0 : i32
    %c0_i32_0 = arith.constant 0 : i32
    return %arg0, %c0_i32 : i32, i32
  }
  func.func @transform_3(%arg0: i32) -> (i32, i32) {
    %c0_i32 = arith.constant 0 : i32
    %c0_i32_0 = arith.constant 0 : i32
    return %arg0, %c0_i32 : i32, i32
  }
}

</mosaic_0001>

<llo_original>
// kernel: fcn_2_layers_forward.1
$region0: #{fcn_2_layers_forward.1}
  #allocation0 [shape = 'u32[]', space=smem, size = 0x4, offset = 0x4, fixed_abs, tag = 'smem constant byte address 0x4 - core index']
  #allocation1 [shape = 'u32[144,128]{1,0:T(1,128)}', space=vmem, size = 0x12000, scoped, tag = 'internal scratch']
  %s0 = inlined_call_operand.vmem [shape: f32[1,64], index: 0, kind: input, shape index: {}]
  %s1 = inlined_call_operand.vmem [shape: f32[64,32], index: 1, kind: input, shape index: {}]
  %s2 = inlined_call_operand.vmem [shape: f32[4000,32], index: 2, kind: input, shape index: {}]
  %s3 = inlined_call_operand.vmem [shape: f32[4000,1], index: 3, kind: output, shape index: {}]
  %s4 = sld [smem:[#allocation0]]
  $region93: #{fcn_2_layers_forward.1} parent=0
    _
  %s6 = ssub.s32 1, %s4
  %s7 = scalar_select 0, %s6, %s4
  $region1: #{fcn_2_layers_forward.1} parent=0
    #allocation2 [shape = 'u8[2097152]{0}', space=vmem, size = 0x200000, scoped, tag = 'output window, operand 0']
    loop: start=0, step=1, limit=4
    $region2: #{fcn_2_layers_forward.1} parent=1 // loop_pre_header
      _
    $region3: #{fcn_2_layers_forward.1} parent=1 // loop_header
      %s9 = sphi 0, %s13
      %p10 = scmp.ge.s32.totalorder %s9, 4
      %s17 = sphi 0, %s17
      %s19 = sphi 0, %s17
      %s20 = sphi 0, %s19
      %s34 = sphi 0, %s20
      %s38 = sphi 0, %s38
      %s40 = sphi 0, %s38
      %s41 = sphi 0, %s40
      %s55 = sphi 0, %s41
      %s61 = sphi 0, %s63
      %s64 = sphi 0, %s61
      %s65 = sphi 0, %s64
      %s81 = sphi 0, %s65
      %s87 = sphi 0, %s89
      %s90 = sphi 0, %s87
      %s91 = sphi 0, %s90
      %s107 = sphi 0, %s91
    $region4: #{fcn_2_layers_forward.1} parent=1 // loop_header_branch
      %12 = sbr.rel (%p10) target = $region8
    $region5: #{fcn_2_layers_forward.1} parent=1 // loop_body
      %s14 = ssub.s32 %s9, 1
      %s15 = ssub.s32 %s9, 2
      %s16 = sadd.s32 %s9, 1
      %s18 = sadd.s32 %s17, 1
      %p21 = scmp.eq.s32.totalorder %s9, 1
      %p22 = scmp.ne.s32.totalorder %s17, %s19
      %p23 = scmp.eq.s32.totalorder %s9, 0
      %p24 = por %p22, %p23
      %p25 = scmp.ne.s32.totalorder %s17, %s19
      %p26 = scmp.eq.s32.totalorder %s14, 1
      %p27 = por %p25, %p26
      %p28 = scmp.ne.s32.totalorder %s19, %s20
      %p29 = scmp.eq.s32.totalorder %s14, 0
      %p30 = por %p28, %p29
      %p31 = scmp.ne.s32.totalorder %s19, %s20
      %p32 = scmp.eq.s32.totalorder %s15, 1
      %p33 = por %p31, %p32
      %p35 = scmp.ne.s32.totalorder %s20, %s34
      %p36 = scmp.eq.s32.totalorder %s15, 0
      %p37 = por %p35, %p36
      %s39 = sadd.s32 %s38, 1
      %p42 = scmp.eq.s32.totalorder %s9, 1
      %p43 = scmp.ne.s32.totalorder %s38, %s40
      %p44 = scmp.eq.s32.totalorder %s9, 0
      %p45 = por %p43, %p44
      %p46 = scmp.ne.s32.totalorder %s38, %s40
      %p47 = scmp.eq.s32.totalorder %s14, 1
      %p48 = por %p46, %p47
      %p49 = scmp.ne.s32.totalorder %s40, %s41
      %p50 = scmp.eq.s32.totalorder %s14, 0
      %p51 = por %p49, %p50
      %p52 = scmp.ne.s32.totalorder %s40, %s41
      %p53 = scmp.eq.s32.totalorder %s15, 1
      %p54 = por %p52, %p53
      %p56 = scmp.ne.s32.totalorder %s41, %s55
      %p57 = scmp.eq.s32.totalorder %s15, 0
      %p58 = por %p56, %p57
      %s59 = ssub.s32 %s9, %s16
      %p60 = scmp.eq.s32.totalorder %s59, 0
      %s62 = sadd.s32 %s61, 1
      %s63 = scalar_select %p60, %s61, %s62
      %p66 = pneg %p60
      %p67 = scmp.eq.s32.totalorder %s9, 1
      %p68 = por %p66, %p67
      %p69 = scmp.ne.s32.totalorder %s61, %s64
      %p70 = scmp.eq.s32.totalorder %s9, 0
      %p71 = por %p69, %p70
      %p72 = scmp.ne.s32.totalorder %s61, %s64
      %p73 = scmp.eq.s32.totalorder %s14, 1
      %p74 = por %p72, %p73
      %p75 = scmp.ne.s32.totalorder %s64, %s65
      %p76 = scmp.eq.s32.totalorder %s14, 0
      %p77 = por %p75, %p76
      %p78 = scmp.ne.s32.totalorder %s64, %s65
      %p79 = scmp.eq.s32.totalorder %s15, 1
      %p80 = por %p78, %p79
      %p82 = scmp.ne.s32.totalorder %s65, %s81
      %p83 = scmp.eq.s32.totalorder %s15, 0
      %p84 = por %p82, %p83
      %s85 = ssub.s32 %s9, %s16
      %p86 = scmp.eq.s32.totalorder %s85, 0
      %s88 = sadd.s32 %s87, 1
      %s89 = scalar_select %p86, %s87, %s88
      %p92 = pneg %p86
      %p93 = scmp.eq.s32.totalorder %s9, 1
      %p94 = por %p92, %p93
      %p95 = scmp.ne.s32.totalorder %s87, %s90
      %p96 = scmp.eq.s32.totalorder %s9, 0
      %p97 = por %p95, %p96
      %p98 = scmp.ne.s32.totalorder %s87, %s90
      %p99 = scmp.eq.s32.totalorder %s14, 1
      %p100 = por %p98, %p99
      %p101 = scmp.ne.s32.totalorder %s90, %s91
      %p102 = scmp.eq.s32.totalorder %s14, 0
      %p103 = por %p101, %p102
      %p104 = scmp.ne.s32.totalorder %s90, %s91
      %p105 = scmp.eq.s32.totalorder %s15, 1
      %p106 = por %p104, %p105
      %p108 = scmp.ne.s32.totalorder %s91, %s107
      %p109 = scmp.eq.s32.totalorder %s15, 0
      %p110 = por %p108, %p109
      %p111 = scmp.le.s32.totalorder 1, %s9
      %p112 = scmp.lt.s32.totalorder %s9, 3
      %p113 = pnand %p111, %p112
      %p114 = pneg %p113
      // Predicated region
      $region9: #{fcn_2_layers_forward.1} parent=5 // pred_check
        _
      $region10: #{fcn_2_layers_forward.1} parent=5 // pred_check_branch
        %116 = sbr.rel (%p113) target = $region12
      $region11: #{fcn_2_layers_forward.1} parent=5 // pred_region
        %s117 = ssub.s32 %s9, 1
        // Predicated region
        $region13: #{fcn_2_layers_forward.1} parent=11 // pred_check
          %p118 = pneg %p30
        $region14: #{fcn_2_layers_forward.1} parent=11 // pred_check_branch
          %120 = sbr.rel (%p118) target = $region16
        $region15: #{fcn_2_layers_forward.1} parent=11 // pred_region
          _
        $region16: #{fcn_2_layers_forward.1} parent=11 // pred_fallthru
          _
        // Predicated region
        $region17: #{fcn_2_layers_forward.1} parent=11 // pred_check
          %p121 = pneg %p51
        $region18: #{fcn_2_layers_forward.1} parent=11 // pred_check_branch
          %123 = sbr.rel (%p121) target = $region20
        $region19: #{fcn_2_layers_forward.1} parent=11 // pred_region
          _
        $region20: #{fcn_2_layers_forward.1} parent=11 // pred_fallthru
          _
      $region12: #{fcn_2_layers_forward.1} parent=5 // pred_fallthru
        _
      %p124 = scmp.lt.s32.totalorder %s9, 2
      // Predicated region
      $region21: #{fcn_2_layers_forward.1} parent=5 // pred_check
        %p125 = pneg %p124
      $region22: #{fcn_2_layers_forward.1} parent=5 // pred_check_branch
        %127 = sbr.rel (%p125) target = $region24
      $region23: #{fcn_2_layers_forward.1} parent=5 // pred_region
        // Predicated region
        $region25: #{fcn_2_layers_forward.1} parent=23 // pred_check
          %p128 = pneg %p71
        $region26: #{fcn_2_layers_forward.1} parent=23 // pred_check_branch
          %130 = sbr.rel (%p128) target = $region28
        $region27: #{fcn_2_layers_forward.1} parent=23 // pred_region
          %s131 = smul.u32 256, %s9
          %s132 = ssub.s32 500, %s131
          %p133 = scmp.lt.s32.totalorder %s132, 256
          %s134 = scalar_select %p133, %s132, 256
          %s135 = smul.u32 128, %s134
          %p136 = scmp.lt.s32.totalorder %s131, 499
          %s137 = scalar_select %p136, %s131, 499
          %s138 = smul.addr %s137, 8
          %s139 = scalar_lea.vmem %s2, %s138
          %s140 = smul.u32 256, %s9
          %s141 = ssub.s32 500, %s140
          %p142 = scmp.lt.s32.totalorder %s141, 256
          %s143 = scalar_select %p142, %s141, 256
          %s144 = smul.u32 128, %s143
        $region28: #{fcn_2_layers_forward.1} parent=23 // pred_fallthru
          _
      $region24: #{fcn_2_layers_forward.1} parent=5 // pred_fallthru
        _
      %p145 = scmp.le.s32.totalorder 1, %s9
      %p146 = scmp.lt.s32.totalorder %s9, 3
      %p147 = pnand %p145, %p146
      %p148 = pneg %p147
      // Predicated region
      $region29: #{fcn_2_layers_forward.1} parent=5 // pred_check
        _
      $region30: #{fcn_2_layers_forward.1} parent=5 // pred_check_branch
        %150 = sbr.rel (%p147) target = $region32
      $region31: #{fcn_2_layers_forward.1} parent=5 // pred_region
        %s151 = ssub.s32 %s9, 1
        %p152 = pneg %p30
        %p153 = pneg %p27
        %p154 = pneg %p51
        %p155 = pneg %p48
        %s156 = smul.u32 256, %s14
        %s157 = ssub.s32 500, %s156
        %p158 = scmp.lt.s32.totalorder %s157, 256
        %s159 = scalar_select %p158, %s157, 256
        %s160 = smul.u32 128, %s159
        %p161 = scmp.lt.s32.totalorder %s156, 499
        %s162 = scalar_select %p161, %s156, 499
        %s163 = smul.addr %s162, 8
        %s164 = scalar_lea.vmem %s2, %s163
        %p165 = pneg %p77
        %p166 = pneg %p74
        %p167 = pneg %p103
        %p168 = pneg %p100
        %s169 = sand.u32 %s90, 1
        %s170 = sand.u32 %s90, 1
        %s171 = smul.addr %s170, 2048
        %s172 = scalar_lea.vmem [#allocation2], %s171
        %s173 = smul.u32 256, %s14
        %s174 = ssub.s32 500, %s173
        %p175 = scmp.lt.s32.totalorder %s174, 256
        %s176 = scalar_select %p175, %s174, 256
        %s177 = smul.u32 128, %s176
        %p178 = scmp.lt.s32.totalorder %s173, 499
        %s179 = scalar_select %p178, %s173, 499
        %s180 = smul.addr %s179, 8
        %s181 = scalar_lea.vmem %s2, %s180
        %s182 = smul.u32 256, %s14
        %s183 = ssub.s32 500, %s182
        %p184 = scmp.lt.s32.totalorder %s183, 256
        %s185 = scalar_select %p184, %s183, 256
        %s186 = smul.u32 128, %s185
        %s187 = smul.u32 256, %s14
        %s188 = ssub.s32 500, %s187
        %p189 = scmp.lt.s32.totalorder %s188, 256
        %s190 = scalar_select %p189, %s188, 256
        %s191 = smul.u32 128, %s190
        %v192 = vld [vmem:[%s0] sm:$0x1]
        %v193 = vld [vmem:[%s1] sm:$0xff]
        %v194 = vld [vmem:[%s1 + $0x8] sm:$0xff]
        %v195 = vld [vmem:[%s1 + $0x10] sm:$0xff]
        %v196 = vld [vmem:[%s1 + $0x18] sm:$0xff]
        %v197 = vld [vmem:[%s1 + $0x20] sm:$0xff]
        %v198 = vld [vmem:[%s1 + $0x28] sm:$0xff]
        %v199 = vld [vmem:[%s1 + $0x30] sm:$0xff]
        %v200 = vld [vmem:[%s1 + $0x38] sm:$0xff]
        %vm201 = vcmask 523264
        %v203 = vsel %vm201, %v192, 0
        %205 = vmatprep.subr.mxu0 0.0
        %206 = vmatpush1.msra.mxu0 0.0
        %207 = vmatprep.subr.mxu0 0.0
        %208 = vmatpush1.msra.mxu0 0.0
        %209 = vmatprep.subr.mxu0 0.0
        %210 = vmatpush1.msra.mxu0 0.0
        %211 = vmatprep.subr.mxu0 0.0
        %212 = vmatpush1.msra.mxu0 0.0
        %213 = vmatprep.subr.mxu0 0.0
        %214 = vmatpush1.msra.mxu0 0.0
        %215 = vmatprep.subr.mxu0 0.0
        %216 = vmatpush1.msra.mxu0 0.0
        %217 = vmatprep.subr.mxu0 0.0
        %218 = vmatpush1.msra.mxu0 0.0
        %219 = vmatprep.subr.mxu0 0.0
        %220 = vmatpush1.msra.mxu0 0.0
        %221 = vmatprep.subr.mxu0 0.0
        %222 = vmatpush1.msra.mxu0 %v200
        %223 = vmatprep.subr.mxu0 0.0
        %224 = vmatpush1.msra.mxu0 %v199
        %225 = vmatprep.subr.mxu0 0.0
        %226 = vmatpush1.msra.mxu0 %v198
        %227 = vmatprep.subr.mxu0 0.0
        %228 = vmatpush1.msra.mxu0 %v197
        %229 = vmatprep.subr.mxu0 0.0
        %230 = vmatpush1.msra.mxu0 %v196
        %231 = vmatprep.subr.mxu0 0.0
        %232 = vmatpush1.msra.mxu0 %v195
        %233 = vmatprep.subr.mxu0 0.0
        %234 = vmatpush1.msra.mxu0 %v194
        %235 = vmatprep.subr.mxu0 0.0
        %236 = vmatpush1.msra.mxu0 %v193
        %237 = vmatprep.subr.mxu0 0.0
        %238 = vmatpush2.msra.mxu0 0.0
        %239 = vmatprep.subr.mxu0 0.0
        %240 = vmatpush2.msra.mxu0 0.0
        %241 = vmatprep.subr.mxu0 0.0
        %242 = vmatpush2.msra.mxu0 0.0
        %243 = vmatprep.subr.mxu0 0.0
        %244 = vmatpush2.msra.mxu0 0.0
        %245 = vmatprep.subr.mxu0 0.0
        %246 = vmatpush2.msra.mxu0 0.0
        %247 = vmatprep.subr.mxu0 0.0
        %248 = vmatpush2.msra.mxu0 0.0
        %249 = vmatprep.subr.mxu0 0.0
        %250 = vmatpush2.msra.mxu0 0.0
        %251 = vmatprep.subr.mxu0 0.0
        %252 = vmatpush2.msra.mxu0 0.0
        %253 = vmatprep.subr.mxu0 0.0
        %254 = vmatpush2.msra.mxu0 0.0
        %255 = vmatprep.subr.mxu0 0.0
        %256 = vmatpush2.msra.mxu0 0.0
        %257 = vmatprep.subr.mxu0 0.0
        %258 = vmatpush2.msra.mxu0 0.0
        %259 = vmatprep.subr.mxu0 0.0
        %260 = vmatpush2.msra.mxu0 0.0
        %261 = vmatprep.subr.mxu0 0.0
        %262 = vmatpush2.msra.mxu0 0.0
        %263 = vmatprep.subr.mxu0 0.0
        %264 = vmatpush2.msra.mxu0 0.0
        %265 = vmatprep.subr.mxu0 0.0
        %266 = vmatpush2.msra.mxu0 0.0
        %267 = vmatprep.subr.mxu0 0.0
        %268 = vmatpush2.msra.mxu0 0.0
        %269 = vmatprep.mubr.f32.mxu0 0.0
        %270 = vmatmul.mubr.f32.gmra.mxu0 %v203
        %v271 = vpop.f32.mrf.mxu0
        %v272 = vadd.f32 0.0, %v271
        %v273 = vpop.f32.mrf.mxu0
        %274 = vdwg.mxu0
        %v275 = vld [vmem:[%s181] sm:$0xff]
        %v276 = vld [vmem:[%s181 + $0x8] sm:$0xff]
        %v277 = vld [vmem:[%s181 + $0x10] sm:$0xff]
        %v278 = vld [vmem:[%s181 + $0x18] sm:$0xff]
        %v279 = vld [vmem:[%s181 + $0x20] sm:$0xff]
        %v280 = vld [vmem:[%s181 + $0x28] sm:$0xff]
        %v281 = vld [vmem:[%s181 + $0x30] sm:$0xff]
        %v282 = vld [vmem:[%s181 + $0x38] sm:$0xff]
        %v283 = vld [vmem:[%s181 + $0x40] sm:$0xff]
        %v284 = vld [vmem:[%s181 + $0x48] sm:$0xff]
        %v285 = vld [vmem:[%s181 + $0x50] sm:$0xff]
        %v286 = vld [vmem:[%s181 + $0x58] sm:$0xff]
        %v287 = vld [vmem:[%s181 + $0x60] sm:$0xff]
        %v288 = vld [vmem:[%s181 + $0x68] sm:$0xff]
        %v289 = vld [vmem:[%s181 + $0x70] sm:$0xff]
        %v290 = vld [vmem:[%s181 + $0x78] sm:$0xff]
        %v291 = vld [vmem:[%s181 + $0x80] sm:$0xff]
        %v292 = vld [vmem:[%s181 + $0x88] sm:$0xff]
        %v293 = vld [vmem:[%s181 + $0x90] sm:$0xff]
        %v294 = vld [vmem:[%s181 + $0x98] sm:$0xff]
        %v295 = vld [vmem:[%s181 + $0xa0] sm:$0xff]
        %v296 = vld [vmem:[%s181 + $0xa8] sm:$0xff]
        %v297 = vld [vmem:[%s181 + $0xb0] sm:$0xff]
        %v298 = vld [vmem:[%s181 + $0xb8] sm:$0xff]
        %v299 = vld [vmem:[%s181 + $0xc0] sm:$0xff]
        %v300 = vld [vmem:[%s181 + $0xc8] sm:$0xff]
        %v301 = vld [vmem:[%s181 + $0xd0] sm:$0xff]
        %v302 = vld [vmem:[%s181 + $0xd8] sm:$0xff]
        %v303 = vld [vmem:[%s181 + $0xe0] sm:$0xff]
        %v304 = vld [vmem:[%s181 + $0xe8] sm:$0xff]
        %v305 = vld [vmem:[%s181 + $0xf0] sm:$0xff]
        %v306 = vld [vmem:[%s181 + $0xf8] sm:$0xff]
        %v307 = vld [vmem:[%s181 + $0x100] sm:$0xff]
        %v308 = vld [vmem:[%s181 + $0x108] sm:$0xff]
        %v309 = vld [vmem:[%s181 + $0x110] sm:$0xff]
        %v310 = vld [vmem:[%s181 + $0x118] sm:$0xff]
        %v311 = vld [vmem:[%s181 + $0x120] sm:$0xff]
        %v312 = vld [vmem:[%s181 + $0x128] sm:$0xff]
        %v313 = vld [vmem:[%s181 + $0x130] sm:$0xff]
        %v314 = vld [vmem:[%s181 + $0x138] sm:$0xff]
        %v315 = vld [vmem:[%s181 + $0x140] sm:$0xff]
        %v316 = vld [vmem:[%s181 + $0x148] sm:$0xff]
        %v317 = vld [vmem:[%s181 + $0x150] sm:$0xff]
        %v318 = vld [vmem:[%s181 + $0x158] sm:$0xff]
        %v319 = vld [vmem:[%s181 + $0x160] sm:$0xff]
        %v320 = vld [vmem:[%s181 + $0x168] sm:$0xff]
        %v321 = vld [vmem:[%s181 + $0x170] sm:$0xff]
        %v322 = vld [vmem:[%s181 + $0x178] sm:$0xff]
        %v323 = vld [vmem:[%s181 + $0x180] sm:$0xff]
        %v324 = vld [vmem:[%s181 + $0x188] sm:$0xff]
        %v325 = vld [vmem:[%s181 + $0x190] sm:$0xff]
        %v326 = vld [vmem:[%s181 + $0x198] sm:$0xff]
        %v327 = vld [vmem:[%s181 + $0x1a0] sm:$0xff]
        %v328 = vld [vmem:[%s181 + $0x1a8] sm:$0xff]
        %v329 = vld [vmem:[%s181 + $0x1b0] sm:$0xff]
        %v330 = vld [vmem:[%s181 + $0x1b8] sm:$0xff]
        %v331 = vld [vmem:[%s181 + $0x1c0] sm:$0xff]
        %v332 = vld [vmem:[%s181 + $0x1c8] sm:$0xff]
        %v333 = vld [vmem:[%s181 + $0x1d0] sm:$0xff]
        %v334 = vld [vmem:[%s181 + $0x1d8] sm:$0xff]
        %v335 = vld [vmem:[%s181 + $0x1e0] sm:$0xff]
        %v336 = vld [vmem:[%s181 + $0x1e8] sm:$0xff]
        %v337 = vld [vmem:[%s181 + $0x1f0] sm:$0xff]
        %v338 = vld [vmem:[%s181 + $0x1f8] sm:$0xff]
        %v339 = vld [vmem:[%s181 + $0x200] sm:$0xff]
        %v340 = vld [vmem:[%s181 + $0x208] sm:$0xff]
        %v341 = vld [vmem:[%s181 + $0x210] sm:$0xff]
        %v342 = vld [vmem:[%s181 + $0x218] sm:$0xff]
        %v343 = vld [vmem:[%s181 + $0x220] sm:$0xff]
        %v344 = vld [vmem:[%s181 + $0x228] sm:$0xff]
        %v345 = vld [vmem:[%s181 + $0x230] sm:$0xff]
        %v346 = vld [vmem:[%s181 + $0x238] sm:$0xff]
        %v347 = vld [vmem:[%s181 + $0x240] sm:$0xff]
        %v348 = vld [vmem:[%s181 + $0x248] sm:$0xff]
        %v349 = vld [vmem:[%s181 + $0x250] sm:$0xff]
        %v350 = vld [vmem:[%s181 + $0x258] sm:$0xff]
        %v351 = vld [vmem:[%s181 + $0x260] sm:$0xff]
        %v352 = vld [vmem:[%s181 + $0x268] sm:$0xff]
        %v353 = vld [vmem:[%s181 + $0x270] sm:$0xff]
        %v354 = vld [vmem:[%s181 + $0x278] sm:$0xff]
        %v355 = vld [vmem:[%s181 + $0x280] sm:$0xff]
        %v356 = vld [vmem:[%s181 + $0x288] sm:$0xff]
        %v357 = vld [vmem:[%s181 + $0x290] sm:$0xff]
        %v358 = vld [vmem:[%s181 + $0x298] sm:$0xff]
        %v359 = vld [vmem:[%s181 + $0x2a0] sm:$0xff]
        %v360 = vld [vmem:[%s181 + $0x2a8] sm:$0xff]
        %v361 = vld [vmem:[%s181 + $0x2b0] sm:$0xff]
        %v362 = vld [vmem:[%s181 + $0x2b8] sm:$0xff]
        %v363 = vld [vmem:[%s181 + $0x2c0] sm:$0xff]
        %v364 = vld [vmem:[%s181 + $0x2c8] sm:$0xff]
        %v365 = vld [vmem:[%s181 + $0x2d0] sm:$0xff]
        %v366 = vld [vmem:[%s181 + $0x2d8] sm:$0xff]
        %v367 = vld [vmem:[%s181 + $0x2e0] sm:$0xff]
        %v368 = vld [vmem:[%s181 + $0x2e8] sm:$0xff]
        %v369 = vld [vmem:[%s181 + $0x2f0] sm:$0xff]
        %v370 = vld [vmem:[%s181 + $0x2f8] sm:$0xff]
        %v371 = vld [vmem:[%s181 + $0x300] sm:$0xff]
        %v372 = vld [vmem:[%s181 + $0x308] sm:$0xff]
        %v373 = vld [vmem:[%s181 + $0x310] sm:$0xff]
        %v374 = vld [vmem:[%s181 + $0x318] sm:$0xff]
        %v375 = vld [vmem:[%s181 + $0x320] sm:$0xff]
        %v376 = vld [vmem:[%s181 + $0x328] sm:$0xff]
        %v377 = vld [vmem:[%s181 + $0x330] sm:$0xff]
        %v378 = vld [vmem:[%s181 + $0x338] sm:$0xff]
        %v379 = vld [vmem:[%s181 + $0x340] sm:$0xff]
        %v380 = vld [vmem:[%s181 + $0x348] sm:$0xff]
        %v381 = vld [vmem:[%s181 + $0x350] sm:$0xff]
        %v382 = vld [vmem:[%s181 + $0x358] sm:$0xff]
        %v383 = vld [vmem:[%s181 + $0x360] sm:$0xff]
        %v384 = vld [vmem:[%s181 + $0x368] sm:$0xff]
        %v385 = vld [vmem:[%s181 + $0x370] sm:$0xff]
        %v386 = vld [vmem:[%s181 + $0x378] sm:$0xff]
        %v387 = vld [vmem:[%s181 + $0x380] sm:$0xff]
        %v388 = vld [vmem:[%s181 + $0x388] sm:$0xff]
        %v389 = vld [vmem:[%s181 + $0x390] sm:$0xff]
        %v390 = vld [vmem:[%s181 + $0x398] sm:$0xff]
        %v391 = vld [vmem:[%s181 + $0x3a0] sm:$0xff]
        %v392 = vld [vmem:[%s181 + $0x3a8] sm:$0xff]
        %v393 = vld [vmem:[%s181 + $0x3b0] sm:$0xff]
        %v394 = vld [vmem:[%s181 + $0x3b8] sm:$0xff]
        %v395 = vld [vmem:[%s181 + $0x3c0] sm:$0xff]
        %v396 = vld [vmem:[%s181 + $0x3c8] sm:$0xff]
        %v397 = vld [vmem:[%s181 + $0x3d0] sm:$0xff]
        %v398 = vld [vmem:[%s181 + $0x3d8] sm:$0xff]
        %v399 = vld [vmem:[%s181 + $0x3e0] sm:$0xff]
        %v400 = vld [vmem:[%s181 + $0x3e8] sm:$0xff]
        %v401 = vld [vmem:[%s181 + $0x3f0] sm:$0xff]
        %v402 = vld [vmem:[%s181 + $0x3f8] sm:$0xff]
        %v403 = vld [vmem:[%s181 + $0x400] sm:$0xff]
        %v404 = vld [vmem:[%s181 + $0x408] sm:$0xff]
        %v405 = vld [vmem:[%s181 + $0x410] sm:$0xff]
        %v406 = vld [vmem:[%s181 + $0x418] sm:$0xff]
        %v407 = vld [vmem:[%s181 + $0x420] sm:$0xff]
        %v408 = vld [vmem:[%s181 + $0x428] sm:$0xff]
        %v409 = vld [vmem:[%s181 + $0x430] sm:$0xff]
        %v410 = vld [vmem:[%s181 + $0x438] sm:$0xff]
        %v411 = vld [vmem:[%s181 + $0x440] sm:$0xff]
        %v412 = vld [vmem:[%s181 + $0x448] sm:$0xff]
        %v413 = vld [vmem:[%s181 + $0x450] sm:$0xff]
        %v414 = vld [vmem:[%s181 + $0x458] sm:$0xff]
        %v415 = vld [vmem:[%s181 + $0x460] sm:$0xff]
        %v416 = vld [vmem:[%s181 + $0x468] sm:$0xff]
        %v417 = vld [vmem:[%s181 + $0x470] sm:$0xff]
        %v418 = vld [vmem:[%s181 + $0x478] sm:$0xff]
        %v419 = vld [vmem:[%s181 + $0x480] sm:$0xff]
        %v420 = vld [vmem:[%s181 + $0x488] sm:$0xff]
        %v421 = vld [vmem:[%s181 + $0x490] sm:$0xff]
        %v422 = vld [vmem:[%s181 + $0x498] sm:$0xff]
        %v423 = vld [vmem:[%s181 + $0x4a0] sm:$0xff]
        %v424 = vld [vmem:[%s181 + $0x4a8] sm:$0xff]
        %v425 = vld [vmem:[%s181 + $0x4b0] sm:$0xff]
        %v426 = vld [vmem:[%s181 + $0x4b8] sm:$0xff]
        %v427 = vld [vmem:[%s181 + $0x4c0] sm:$0xff]
        %v428 = vld [vmem:[%s181 + $0x4c8] sm:$0xff]
        %v429 = vld [vmem:[%s181 + $0x4d0] sm:$0xff]
        %v430 = vld [vmem:[%s181 + $0x4d8] sm:$0xff]
        %v431 = vld [vmem:[%s181 + $0x4e0] sm:$0xff]
        %v432 = vld [vmem:[%s181 + $0x4e8] sm:$0xff]
        %v433 = vld [vmem:[%s181 + $0x4f0] sm:$0xff]
        %v434 = vld [vmem:[%s181 + $0x4f8] sm:$0xff]
        %v435 = vld [vmem:[%s181 + $0x500] sm:$0xff]
        %v436 = vld [vmem:[%s181 + $0x508] sm:$0xff]
        %v437 = vld [vmem:[%s181 + $0x510] sm:$0xff]
        %v438 = vld [vmem:[%s181 + $0x518] sm:$0xff]
        %v439 = vld [vmem:[%s181 + $0x520] sm:$0xff]
        %v440 = vld [vmem:[%s181 + $0x528] sm:$0xff]
        %v441 = vld [vmem:[%s181 + $0x530] sm:$0xff]
        %v442 = vld [vmem:[%s181 + $0x538] sm:$0xff]
        %v443 = vld [vmem:[%s181 + $0x540] sm:$0xff]
        %v444 = vld [vmem:[%s181 + $0x548] sm:$0xff]
        %v445 = vld [vmem:[%s181 + $0x550] sm:$0xff]
        %v446 = vld [vmem:[%s181 + $0x558] sm:$0xff]
        %v447 = vld [vmem:[%s181 + $0x560] sm:$0xff]
        %v448 = vld [vmem:[%s181 + $0x568] sm:$0xff]
        %v449 = vld [vmem:[%s181 + $0x570] sm:$0xff]
        %v450 = vld [vmem:[%s181 + $0x578] sm:$0xff]
        %v451 = vld [vmem:[%s181 + $0x580] sm:$0xff]
        %v452 = vld [vmem:[%s181 + $0x588] sm:$0xff]
        %v453 = vld [vmem:[%s181 + $0x590] sm:$0xff]
        %v454 = vld [vmem:[%s181 + $0x598] sm:$0xff]
        %v455 = vld [vmem:[%s181 + $0x5a0] sm:$0xff]
        %v456 = vld [vmem:[%s181 + $0x5a8] sm:$0xff]
        %v457 = vld [vmem:[%s181 + $0x5b0] sm:$0xff]
        %v458 = vld [vmem:[%s181 + $0x5b8] sm:$0xff]
        %v459 = vld [vmem:[%s181 + $0x5c0] sm:$0xff]
        %v460 = vld [vmem:[%s181 + $0x5c8] sm:$0xff]
        %v461 = vld [vmem:[%s181 + $0x5d0] sm:$0xff]
        %v462 = vld [vmem:[%s181 + $0x5d8] sm:$0xff]
        %v463 = vld [vmem:[%s181 + $0x5e0] sm:$0xff]
        %v464 = vld [vmem:[%s181 + $0x5e8] sm:$0xff]
        %v465 = vld [vmem:[%s181 + $0x5f0] sm:$0xff]
        %v466 = vld [vmem:[%s181 + $0x5f8] sm:$0xff]
        %v467 = vld [vmem:[%s181 + $0x600] sm:$0xff]
        %v468 = vld [vmem:[%s181 + $0x608] sm:$0xff]
        %v469 = vld [vmem:[%s181 + $0x610] sm:$0xff]
        %v470 = vld [vmem:[%s181 + $0x618] sm:$0xff]
        %v471 = vld [vmem:[%s181 + $0x620] sm:$0xff]
        %v472 = vld [vmem:[%s181 + $0x628] sm:$0xff]
        %v473 = vld [vmem:[%s181 + $0x630] sm:$0xff]
        %v474 = vld [vmem:[%s181 + $0x638] sm:$0xff]
        %v475 = vld [vmem:[%s181 + $0x640] sm:$0xff]
        %v476 = vld [vmem:[%s181 + $0x648] sm:$0xff]
        %v477 = vld [vmem:[%s181 + $0x650] sm:$0xff]
        %v478 = vld [vmem:[%s181 + $0x658] sm:$0xff]
        %v479 = vld [vmem:[%s181 + $0x660] sm:$0xff]
        %v480 = vld [vmem:[%s181 + $0x668] sm:$0xff]
        %v481 = vld [vmem:[%s181 + $0x670] sm:$0xff]
        %v482 = vld [vmem:[%s181 + $0x678] sm:$0xff]
        %v483 = vld [vmem:[%s181 + $0x680] sm:$0xff]
        %v484 = vld [vmem:[%s181 + $0x688] sm:$0xff]
        %v485 = vld [vmem:[%s181 + $0x690] sm:$0xff]
        %v486 = vld [vmem:[%s181 + $0x698] sm:$0xff]
        %v487 = vld [vmem:[%s181 + $0x6a0] sm:$0xff]
        %v488 = vld [vmem:[%s181 + $0x6a8] sm:$0xff]
        %v489 = vld [vmem:[%s181 + $0x6b0] sm:$0xff]
        %v490 = vld [vmem:[%s181 + $0x6b8] sm:$0xff]
        %v491 = vld [vmem:[%s181 + $0x6c0] sm:$0xff]
        %v492 = vld [vmem:[%s181 + $0x6c8] sm:$0xff]
        %v493 = vld [vmem:[%s181 + $0x6d0] sm:$0xff]
        %v494 = vld [vmem:[%s181 + $0x6d8] sm:$0xff]
        %v495 = vld [vmem:[%s181 + $0x6e0] sm:$0xff]
        %v496 = vld [vmem:[%s181 + $0x6e8] sm:$0xff]
        %v497 = vld [vmem:[%s181 + $0x6f0] sm:$0xff]
        %v498 = vld [vmem:[%s181 + $0x6f8] sm:$0xff]
        %v499 = vld [vmem:[%s181 + $0x700] sm:$0xff]
        %v500 = vld [vmem:[%s181 + $0x708] sm:$0xff]
        %v501 = vld [vmem:[%s181 + $0x710] sm:$0xff]
        %v502 = vld [vmem:[%s181 + $0x718] sm:$0xff]
        %v503 = vld [vmem:[%s181 + $0x720] sm:$0xff]
        %v504 = vld [vmem:[%s181 + $0x728] sm:$0xff]
        %v505 = vld [vmem:[%s181 + $0x730] sm:$0xff]
        %v506 = vld [vmem:[%s181 + $0x738] sm:$0xff]
        %v507 = vld [vmem:[%s181 + $0x740] sm:$0xff]
        %v508 = vld [vmem:[%s181 + $0x748] sm:$0xff]
        %v509 = vld [vmem:[%s181 + $0x750] sm:$0xff]
        %v510 = vld [vmem:[%s181 + $0x758] sm:$0xff]
        %v511 = vld [vmem:[%s181 + $0x760] sm:$0xff]
        %v512 = vld [vmem:[%s181 + $0x768] sm:$0xff]
        %v513 = vld [vmem:[%s181 + $0x770] sm:$0xff]
        %v514 = vld [vmem:[%s181 + $0x778] sm:$0xff]
        %v515 = vld [vmem:[%s181 + $0x780] sm:$0xff]
        %v516 = vld [vmem:[%s181 + $0x788] sm:$0xff]
        %v517 = vld [vmem:[%s181 + $0x790] sm:$0xff]
        %v518 = vld [vmem:[%s181 + $0x798] sm:$0xff]
        %v519 = vld [vmem:[%s181 + $0x7a0] sm:$0xff]
        %v520 = vld [vmem:[%s181 + $0x7a8] sm:$0xff]
        %v521 = vld [vmem:[%s181 + $0x7b0] sm:$0xff]
        %v522 = vld [vmem:[%s181 + $0x7b8] sm:$0xff]
        %v523 = vld [vmem:[%s181 + $0x7c0] sm:$0xff]
        %v524 = vld [vmem:[%s181 + $0x7c8] sm:$0xff]
        %v525 = vld [vmem:[%s181 + $0x7d0] sm:$0xff]
        %v526 = vld [vmem:[%s181 + $0x7d8] sm:$0xff]
        %v527 = vld [vmem:[%s181 + $0x7e0] sm:$0xff]
        %v528 = vld [vmem:[%s181 + $0x7e8] sm:$0xff]
        %v529 = vld [vmem:[%s181 + $0x7f0] sm:$0xff]
        %v530 = vld [vmem:[%s181 + $0x7f8] sm:$0xff]
        %v531 = vlaneseq
        %v532 = vshrl.u32 %v531, 7
        %v533 = vsub.s32 0, %v532
        %v534 = vrot.slane %v272, %v533
        %v535 = vmul.f32 %v275, %v534
        %v536 = vmul.f32 %v276, %v534
        %v537 = vmul.f32 %v277, %v534
        %v538 = vmul.f32 %v278, %v534
        %v539 = vmul.f32 %v279, %v534
        %v540 = vmul.f32 %v280, %v534
        %v541 = vmul.f32 %v281, %v534
        %v542 = vmul.f32 %v282, %v534
        %v543 = vmul.f32 %v283, %v534
        %v544 = vmul.f32 %v284, %v534
        %v545 = vmul.f32 %v285, %v534
        %v546 = vmul.f32 %v286, %v534
        %v547 = vmul.f32 %v287, %v534
        %v548 = vmul.f32 %v288, %v534
        %v549 = vmul.f32 %v289, %v534
        %v550 = vmul.f32 %v290, %v534
        %v551 = vmul.f32 %v291, %v534
        %v552 = vmul.f32 %v292, %v534
        %v553 = vmul.f32 %v293, %v534
        %v554 = vmul.f32 %v294, %v534
        %v555 = vmul.f32 %v295, %v534
        %v556 = vmul.f32 %v296, %v534
        %v557 = vmul.f32 %v297, %v534
        %v558 = vmul.f32 %v298, %v534
        %v559 = vmul.f32 %v299, %v534
        %v560 = vmul.f32 %v300, %v534
        %v561 = vmul.f32 %v301, %v534
        %v562 = vmul.f32 %v302, %v534
        %v563 = vmul.f32 %v303, %v534
        %v564 = vmul.f32 %v304, %v534
        %v565 = vmul.f32 %v305, %v534
        %v566 = vmul.f32 %v306, %v534
        %v567 = vmul.f32 %v307, %v534
        %v568 = vmul.f32 %v308, %v534
        %v569 = vmul.f32 %v309, %v534
        %v570 = vmul.f32 %v310, %v534
        %v571 = vmul.f32 %v311, %v534
        %v572 = vmul.f32 %v312, %v534
        %v573 = vmul.f32 %v313, %v534
        %v574 = vmul.f32 %v314, %v534
        %v575 = vmul.f32 %v315, %v534
        %v576 = vmul.f32 %v316, %v534
        %v577 = vmul.f32 %v317, %v534
        %v578 = vmul.f32 %v318, %v534
        %v579 = vmul.f32 %v319, %v534
        %v580 = vmul.f32 %v320, %v534
        %v581 = vmul.f32 %v321, %v534
        %v582 = vmul.f32 %v322, %v534
        %v583 = vmul.f32 %v323, %v534
        %v584 = vmul.f32 %v324, %v534
        %v585 = vmul.f32 %v325, %v534
        %v586 = vmul.f32 %v326, %v534
        %v587 = vmul.f32 %v327, %v534
        %v588 = vmul.f32 %v328, %v534
        %v589 = vmul.f32 %v329, %v534
        %v590 = vmul.f32 %v330, %v534
        %v591 = vmul.f32 %v331, %v534
        %v592 = vmul.f32 %v332, %v534
        %v593 = vmul.f32 %v333, %v534
        %v594 = vmul.f32 %v334, %v534
        %v595 = vmul.f32 %v335, %v534
        %v596 = vmul.f32 %v336, %v534
        %v597 = vmul.f32 %v337, %v534
        %v598 = vmul.f32 %v338, %v534
        %v599 = vmul.f32 %v339, %v534
        %v600 = vmul.f32 %v340, %v534
        %v601 = vmul.f32 %v341, %v534
        %v602 = vmul.f32 %v342, %v534
        %v603 = vmul.f32 %v343, %v534
        %v604 = vmul.f32 %v344, %v534
        %v605 = vmul.f32 %v345, %v534
        %v606 = vmul.f32 %v346, %v534
        %v607 = vmul.f32 %v347, %v534
        %v608 = vmul.f32 %v348, %v534
        %v609 = vmul.f32 %v349, %v534
        %v610 = vmul.f32 %v350, %v534
        %v611 = vmul.f32 %v351, %v534
        %v612 = vmul.f32 %v352, %v534
        %v613 = vmul.f32 %v353, %v534
        %v614 = vmul.f32 %v354, %v534
        %v615 = vmul.f32 %v355, %v534
        %v616 = vmul.f32 %v356, %v534
        %v617 = vmul.f32 %v357, %v534
        %v618 = vmul.f32 %v358, %v534
        %v619 = vmul.f32 %v359, %v534
        %v620 = vmul.f32 %v360, %v534
        %v621 = vmul.f32 %v361, %v534
        %v622 = vmul.f32 %v362, %v534
        %v623 = vmul.f32 %v363, %v534
        %v624 = vmul.f32 %v364, %v534
        %v625 = vmul.f32 %v365, %v534
        %v626 = vmul.f32 %v366, %v534
        %v627 = vmul.f32 %v367, %v534
        %v628 = vmul.f32 %v368, %v534
        %v629 = vmul.f32 %v369, %v534
        %v630 = vmul.f32 %v370, %v534
        %v631 = vmul.f32 %v371, %v534
        %v632 = vmul.f32 %v372, %v534
        %v633 = vmul.f32 %v373, %v534
        %v634 = vmul.f32 %v374, %v534
        %v635 = vmul.f32 %v375, %v534
        %v636 = vmul.f32 %v376, %v534
        %v637 = vmul.f32 %v377, %v534
        %v638 = vmul.f32 %v378, %v534
        %v639 = vmul.f32 %v379, %v534
        %v640 = vmul.f32 %v380, %v534
        %v641 = vmul.f32 %v381, %v534
        %v642 = vmul.f32 %v382, %v534
        %v643 = vmul.f32 %v383, %v534
        %v644 = vmul.f32 %v384, %v534
        %v645 = vmul.f32 %v385, %v534
        %v646 = vmul.f32 %v386, %v534
        %v647 = vmul.f32 %v387, %v534
        %v648 = vmul.f32 %v388, %v534
        %v649 = vmul.f32 %v389, %v534
        %v650 = vmul.f32 %v390, %v534
        %v651 = vmul.f32 %v391, %v534
        %v652 = vmul.f32 %v392, %v534
        %v653 = vmul.f32 %v393, %v534
        %v654 = vmul.f32 %v394, %v534
        %v655 = vmul.f32 %v395, %v534
        %v656 = vmul.f32 %v396, %v534
        %v657 = vmul.f32 %v397, %v534
        %v658 = vmul.f32 %v398, %v534
        %v659 = vmul.f32 %v399, %v534
        %v660 = vmul.f32 %v400, %v534
        %v661 = vmul.f32 %v401, %v534
        %v662 = vmul.f32 %v402, %v534
        %v663 = vmul.f32 %v403, %v534
        %v664 = vmul.f32 %v404, %v534
        %v665 = vmul.f32 %v405, %v534
        %v666 = vmul.f32 %v406, %v534
        %v667 = vmul.f32 %v407, %v534
        %v668 = vmul.f32 %v408, %v534
        %v669 = vmul.f32 %v409, %v534
        %v670 = vmul.f32 %v410, %v534
        %v671 = vmul.f32 %v411, %v534
        %v672 = vmul.f32 %v412, %v534
        %v673 = vmul.f32 %v413, %v534
        %v674 = vmul.f32 %v414, %v534
        %v675 = vmul.f32 %v415, %v534
        %v676 = vmul.f32 %v416, %v534
        %v677 = vmul.f32 %v417, %v534
        %v678 = vmul.f32 %v418, %v534
        %v679 = vmul.f32 %v419, %v534
        %v680 = vmul.f32 %v420, %v534
        %v681 = vmul.f32 %v421, %v534
        %v682 = vmul.f32 %v422, %v534
        %v683 = vmul.f32 %v423, %v534
        %v684 = vmul.f32 %v424, %v534
        %v685 = vmul.f32 %v425, %v534
        %v686 = vmul.f32 %v426, %v534
        %v687 = vmul.f32 %v427, %v534
        %v688 = vmul.f32 %v428, %v534
        %v689 = vmul.f32 %v429, %v534
        %v690 = vmul.f32 %v430, %v534
        %v691 = vmul.f32 %v431, %v534
        %v692 = vmul.f32 %v432, %v534
        %v693 = vmul.f32 %v433, %v534
        %v694 = vmul.f32 %v434, %v534
        %v695 = vmul.f32 %v435, %v534
        %v696 = vmul.f32 %v436, %v534
        %v697 = vmul.f32 %v437, %v534
        %v698 = vmul.f32 %v438, %v534
        %v699 = vmul.f32 %v439, %v534
        %v700 = vmul.f32 %v440, %v534
        %v701 = vmul.f32 %v441, %v534
        %v702 = vmul.f32 %v442, %v534
        %v703 = vmul.f32 %v443, %v534
        %v704 = vmul.f32 %v444, %v534
        %v705 = vmul.f32 %v445, %v534
        %v706 = vmul.f32 %v446, %v534
        %v707 = vmul.f32 %v447, %v534
        %v708 = vmul.f32 %v448, %v534
        %v709 = vmul.f32 %v449, %v534
        %v710 = vmul.f32 %v450, %v534
        %v711 = vmul.f32 %v451, %v534
        %v712 = vmul.f32 %v452, %v534
        %v713 = vmul.f32 %v453, %v534
        %v714 = vmul.f32 %v454, %v534
        %v715 = vmul.f32 %v455, %v534
        %v716 = vmul.f32 %v456, %v534
        %v717 = vmul.f32 %v457, %v534
        %v718 = vmul.f32 %v458, %v534
        %v719 = vmul.f32 %v459, %v534
        %v720 = vmul.f32 %v460, %v534
        %v721 = vmul.f32 %v461, %v534
        %v722 = vmul.f32 %v462, %v534
        %v723 = vmul.f32 %v463, %v534
        %v724 = vmul.f32 %v464, %v534
        %v725 = vmul.f32 %v465, %v534
        %v726 = vmul.f32 %v466, %v534
        %v727 = vmul.f32 %v467, %v534
        %v728 = vmul.f32 %v468, %v534
        %v729 = vmul.f32 %v469, %v534
        %v730 = vmul.f32 %v470, %v534
        %v731 = vmul.f32 %v471, %v534
        %v732 = vmul.f32 %v472, %v534
        %v733 = vmul.f32 %v473, %v534
        %v734 = vmul.f32 %v474, %v534
        %v735 = vmul.f32 %v475, %v534
        %v736 = vmul.f32 %v476, %v534
        %v737 = vmul.f32 %v477, %v534
        %v738 = vmul.f32 %v478, %v534
        %v739 = vmul.f32 %v479, %v534
        %v740 = vmul.f32 %v480, %v534
        %v741 = vmul.f32 %v481, %v534
        %v742 = vmul.f32 %v482, %v534
        %v743 = vmul.f32 %v483, %v534
        %v744 = vmul.f32 %v484, %v534
        %v745 = vmul.f32 %v485, %v534
        %v746 = vmul.f32 %v486, %v534
        %v747 = vmul.f32 %v487, %v534
        %v748 = vmul.f32 %v488, %v534
        %v749 = vmul.f32 %v489, %v534
        %v750 = vmul.f32 %v490, %v534
        %v751 = vmul.f32 %v491, %v534
        %v752 = vmul.f32 %v492, %v534
        %v753 = vmul.f32 %v493, %v534
        %v754 = vmul.f32 %v494, %v534
        %v755 = vmul.f32 %v495, %v534
        %v756 = vmul.f32 %v496, %v534
        %v757 = vmul.f32 %v497, %v534
        %v758 = vmul.f32 %v498, %v534
        %v759 = vmul.f32 %v499, %v534
        %v760 = vmul.f32 %v500, %v534
        %v761 = vmul.f32 %v501, %v534
        %v762 = vmul.f32 %v502, %v534
        %v763 = vmul.f32 %v503, %v534
        %v764 = vmul.f32 %v504, %v534
        %v765 = vmul.f32 %v505, %v534
        %v766 = vmul.f32 %v506, %v534
        %v767 = vmul.f32 %v507, %v534
        %v768 = vmul.f32 %v508, %v534
        %v769 = vmul.f32 %v509, %v534
        %v770 = vmul.f32 %v510, %v534
        %v771 = vmul.f32 %v511, %v534
        %v772 = vmul.f32 %v512, %v534
        %v773 = vmul.f32 %v513, %v534
        %v774 = vmul.f32 %v514, %v534
        %v775 = vmul.f32 %v515, %v534
        %v776 = vmul.f32 %v516, %v534
        %v777 = vmul.f32 %v517, %v534
        %v778 = vmul.f32 %v518, %v534
        %v779 = vmul.f32 %v519, %v534
        %v780 = vmul.f32 %v520, %v534
        %v781 = vmul.f32 %v521, %v534
        %v782 = vmul.f32 %v522, %v534
        %v783 = vmul.f32 %v523, %v534
        %v784 = vmul.f32 %v524, %v534
        %v785 = vmul.f32 %v525, %v534
        %v786 = vmul.f32 %v526, %v534
        %v787 = vmul.f32 %v527, %v534
        %v788 = vmul.f32 %v528, %v534
        %v789 = vmul.f32 %v529, %v534
        %v790 = vmul.f32 %v530, %v534
        %vm791 = vcmask 261120
        %v792 = vsel %vm791, %v535, 0.0
        %793 = vadd.xlane.f32.xlu0 %v792
        %v794 = vpop.xlane.xlu0 %793
        %v795 = vsel %vm791, %v536, 0.0
        %796 = vadd.xlane.f32.xlu0 %v795
        %v797 = vpop.xlane.xlu0 %796
        %v798 = vsel %vm791, %v537, 0.0
        %799 = vadd.xlane.f32.xlu0 %v798
        %v800 = vpop.xlane.xlu0 %799
        %v801 = vsel %vm791, %v538, 0.0
        %802 = vadd.xlane.f32.xlu0 %v801
        %v803 = vpop.xlane.xlu0 %802
        %v804 = vsel %vm791, %v539, 0.0
        %805 = vadd.xlane.f32.xlu0 %v804
        %v806 = vpop.xlane.xlu0 %805
        %v807 = vsel %vm791, %v540, 0.0
        %808 = vadd.xlane.f32.xlu0 %v807
        %v809 = vpop.xlane.xlu0 %808
        %v810 = vsel %vm791, %v541, 0.0
        %811 = vadd.xlane.f32.xlu0 %v810
        %v812 = vpop.xlane.xlu0 %811
        %v813 = vsel %vm791, %v542, 0.0
        %814 = vadd.xlane.f32.xlu0 %v813
        %v815 = vpop.xlane.xlu0 %814
        %v816 = vsel %vm791, %v543, 0.0
        %817 = vadd.xlane.f32.xlu0 %v816
        %v818 = vpop.xlane.xlu0 %817
        %v819 = vsel %vm791, %v544, 0.0
        %820 = vadd.xlane.f32.xlu0 %v819
        %v821 = vpop.xlane.xlu0 %820
        %v822 = vsel %vm791, %v545, 0.0
        %823 = vadd.xlane.f32.xlu0 %v822
        %v824 = vpop.xlane.xlu0 %823
        %v825 = vsel %vm791, %v546, 0.0
        %826 = vadd.xlane.f32.xlu0 %v825
        %v827 = vpop.xlane.xlu0 %826
        %v828 = vsel %vm791, %v547, 0.0
        %829 = vadd.xlane.f32.xlu0 %v828
        %v830 = vpop.xlane.xlu0 %829
        %v831 = vsel %vm791, %v548, 0.0
        %832 = vadd.xlane.f32.xlu0 %v831
        %v833 = vpop.xlane.xlu0 %832
        %v834 = vsel %vm791, %v549, 0.0
        %835 = vadd.xlane.f32.xlu0 %v834
        %v836 = vpop.xlane.xlu0 %835
        %v837 = vsel %vm791, %v550, 0.0
        %838 = vadd.xlane.f32.xlu0 %v837
        %v839 = vpop.xlane.xlu0 %838
        %v840 = vsel %vm791, %v551, 0.0
        %841 = vadd.xlane.f32.xlu0 %v840
        %v842 = vpop.xlane.xlu0 %841
        %v843 = vsel %vm791, %v552, 0.0
        %844 = vadd.xlane.f32.xlu0 %v843
        %v845 = vpop.xlane.xlu0 %844
        %v846 = vsel %vm791, %v553, 0.0
        %847 = vadd.xlane.f32.xlu0 %v846
        %v848 = vpop.xlane.xlu0 %847
        %v849 = vsel %vm791, %v554, 0.0
        %850 = vadd.xlane.f32.xlu0 %v849
        %v851 = vpop.xlane.xlu0 %850
        %v852 = vsel %vm791, %v555, 0.0
        %853 = vadd.xlane.f32.xlu0 %v852
        %v854 = vpop.xlane.xlu0 %853
        %v855 = vsel %vm791, %v556, 0.0
        %856 = vadd.xlane.f32.xlu0 %v855
        %v857 = vpop.xlane.xlu0 %856
        %v858 = vsel %vm791, %v557, 0.0
        %859 = vadd.xlane.f32.xlu0 %v858
        %v860 = vpop.xlane.xlu0 %859
        %v861 = vsel %vm791, %v558, 0.0
        %862 = vadd.xlane.f32.xlu0 %v861
        %v863 = vpop.xlane.xlu0 %862
        %v864 = vsel %vm791, %v559, 0.0
        %865 = vadd.xlane.f32.xlu0 %v864
        %v866 = vpop.xlane.xlu0 %865
        %v867 = vsel %vm791, %v560, 0.0
        %868 = vadd.xlane.f32.xlu0 %v867
        %v869 = vpop.xlane.xlu0 %868
        %v870 = vsel %vm791, %v561, 0.0
        %871 = vadd.xlane.f32.xlu0 %v870
        %v872 = vpop.xlane.xlu0 %871
        %v873 = vsel %vm791, %v562, 0.0
        %874 = vadd.xlane.f32.xlu0 %v873
        %v875 = vpop.xlane.xlu0 %874
        %v876 = vsel %vm791, %v563, 0.0
        %877 = vadd.xlane.f32.xlu0 %v876
        %v878 = vpop.xlane.xlu0 %877
        %v879 = vsel %vm791, %v564, 0.0
        %880 = vadd.xlane.f32.xlu0 %v879
        %v881 = vpop.xlane.xlu0 %880
        %v882 = vsel %vm791, %v565, 0.0
        %883 = vadd.xlane.f32.xlu0 %v882
        %v884 = vpop.xlane.xlu0 %883
        %v885 = vsel %vm791, %v566, 0.0
        %886 = vadd.xlane.f32.xlu0 %v885
        %v887 = vpop.xlane.xlu0 %886
        %v888 = vsel %vm791, %v567, 0.0
        %889 = vadd.xlane.f32.xlu0 %v888
        %v890 = vpop.xlane.xlu0 %889
        %v891 = vsel %vm791, %v568, 0.0
        %892 = vadd.xlane.f32.xlu0 %v891
        %v893 = vpop.xlane.xlu0 %892
        %v894 = vsel %vm791, %v569, 0.0
        %895 = vadd.xlane.f32.xlu0 %v894
        %v896 = vpop.xlane.xlu0 %895
        %v897 = vsel %vm791, %v570, 0.0
        %898 = vadd.xlane.f32.xlu0 %v897
        %v899 = vpop.xlane.xlu0 %898
        %v900 = vsel %vm791, %v571, 0.0
        %901 = vadd.xlane.f32.xlu0 %v900
        %v902 = vpop.xlane.xlu0 %901
        %v903 = vsel %vm791, %v572, 0.0
        %904 = vadd.xlane.f32.xlu0 %v903
        %v905 = vpop.xlane.xlu0 %904
        %v906 = vsel %vm791, %v573, 0.0
        %907 = vadd.xlane.f32.xlu0 %v906
        %v908 = vpop.xlane.xlu0 %907
        %v909 = vsel %vm791, %v574, 0.0
        %910 = vadd.xlane.f32.xlu0 %v909
        %v911 = vpop.xlane.xlu0 %910
        %v912 = vsel %vm791, %v575, 0.0
        %913 = vadd.xlane.f32.xlu0 %v912
        %v914 = vpop.xlane.xlu0 %913
        %v915 = vsel %vm791, %v576, 0.0
        %916 = vadd.xlane.f32.xlu0 %v915
        %v917 = vpop.xlane.xlu0 %916
        %v918 = vsel %vm791, %v577, 0.0
        %919 = vadd.xlane.f32.xlu0 %v918
        %v920 = vpop.xlane.xlu0 %919
        %v921 = vsel %vm791, %v578, 0.0
        %922 = vadd.xlane.f32.xlu0 %v921
        %v923 = vpop.xlane.xlu0 %922
        %v924 = vsel %vm791, %v579, 0.0
        %925 = vadd.xlane.f32.xlu0 %v924
        %v926 = vpop.xlane.xlu0 %925
        %v927 = vsel %vm791, %v580, 0.0
        %928 = vadd.xlane.f32.xlu0 %v927
        %v929 = vpop.xlane.xlu0 %928
        %v930 = vsel %vm791, %v581, 0.0
        %931 = vadd.xlane.f32.xlu0 %v930
        %v932 = vpop.xlane.xlu0 %931
        %v933 = vsel %vm791, %v582, 0.0
        %934 = vadd.xlane.f32.xlu0 %v933
        %v935 = vpop.xlane.xlu0 %934
        %v936 = vsel %vm791, %v583, 0.0
        %937 = vadd.xlane.f32.xlu0 %v936
        %v938 = vpop.xlane.xlu0 %937
        %v939 = vsel %vm791, %v584, 0.0
        %940 = vadd.xlane.f32.xlu0 %v939
        %v941 = vpop.xlane.xlu0 %940
        %v942 = vsel %vm791, %v585, 0.0
        %943 = vadd.xlane.f32.xlu0 %v942
        %v944 = vpop.xlane.xlu0 %943
        %v945 = vsel %vm791, %v586, 0.0
        %946 = vadd.xlane.f32.xlu0 %v945
        %v947 = vpop.xlane.xlu0 %946
        %v948 = vsel %vm791, %v587, 0.0
        %949 = vadd.xlane.f32.xlu0 %v948
        %v950 = vpop.xlane.xlu0 %949
        %v951 = vsel %vm791, %v588, 0.0
        %952 = vadd.xlane.f32.xlu0 %v951
        %v953 = vpop.xlane.xlu0 %952
        %v954 = vsel %vm791, %v589, 0.0
        %955 = vadd.xlane.f32.xlu0 %v954
        %v956 = vpop.xlane.xlu0 %955
        %v957 = vsel %vm791, %v590, 0.0
        %958 = vadd.xlane.f32.xlu0 %v957
        %v959 = vpop.xlane.xlu0 %958
        %v960 = vsel %vm791, %v591, 0.0
        %961 = vadd.xlane.f32.xlu0 %v960
        %v962 = vpop.xlane.xlu0 %961
        %v963 = vsel %vm791, %v592, 0.0
        %964 = vadd.xlane.f32.xlu0 %v963
        %v965 = vpop.xlane.xlu0 %964
        %v966 = vsel %vm791, %v593, 0.0
        %967 = vadd.xlane.f32.xlu0 %v966
        %v968 = vpop.xlane.xlu0 %967
        %v969 = vsel %vm791, %v594, 0.0
        %970 = vadd.xlane.f32.xlu0 %v969
        %v971 = vpop.xlane.xlu0 %970
        %v972 = vsel %vm791, %v595, 0.0
        %973 = vadd.xlane.f32.xlu0 %v972
        %v974 = vpop.xlane.xlu0 %973
        %v975 = vsel %vm791, %v596, 0.0
        %976 = vadd.xlane.f32.xlu0 %v975
        %v977 = vpop.xlane.xlu0 %976
        %v978 = vsel %vm791, %v597, 0.0
        %979 = vadd.xlane.f32.xlu0 %v978
        %v980 = vpop.xlane.xlu0 %979
        %v981 = vsel %vm791, %v598, 0.0
        %982 = vadd.xlane.f32.xlu0 %v981
        %v983 = vpop.xlane.xlu0 %982
        %v984 = vsel %vm791, %v599, 0.0
        %985 = vadd.xlane.f32.xlu0 %v984
        %v986 = vpop.xlane.xlu0 %985
        %v987 = vsel %vm791, %v600, 0.0
        %988 = vadd.xlane.f32.xlu0 %v987
        %v989 = vpop.xlane.xlu0 %988
        %v990 = vsel %vm791, %v601, 0.0
        %991 = vadd.xlane.f32.xlu0 %v990
        %v992 = vpop.xlane.xlu0 %991
        %v993 = vsel %vm791, %v602, 0.0
        %994 = vadd.xlane.f32.xlu0 %v993
        %v995 = vpop.xlane.xlu0 %994
        %v996 = vsel %vm791, %v603, 0.0
        %997 = vadd.xlane.f32.xlu0 %v996
        %v998 = vpop.xlane.xlu0 %997
        %v999 = vsel %vm791, %v604, 0.0
        %1000 = vadd.xlane.f32.xlu0 %v999
        %v1001 = vpop.xlane.xlu0 %1000
        %v1002 = vsel %vm791, %v605, 0.0
        %1003 = vadd.xlane.f32.xlu0 %v1002
        %v1004 = vpop.xlane.xlu0 %1003
        %v1005 = vsel %vm791, %v606, 0.0
        %1006 = vadd.xlane.f32.xlu0 %v1005
        %v1007 = vpop.xlane.xlu0 %1006
        %v1008 = vsel %vm791, %v607, 0.0
        %1009 = vadd.xlane.f32.xlu0 %v1008
        %v1010 = vpop.xlane.xlu0 %1009
        %v1011 = vsel %vm791, %v608, 0.0
        %1012 = vadd.xlane.f32.xlu0 %v1011
        %v1013 = vpop.xlane.xlu0 %1012
        %v1014 = vsel %vm791, %v609, 0.0
        %1015 = vadd.xlane.f32.xlu0 %v1014
        %v1016 = vpop.xlane.xlu0 %1015
        %v1017 = vsel %vm791, %v610, 0.0
        %1018 = vadd.xlane.f32.xlu0 %v1017
        %v1019 = vpop.xlane.xlu0 %1018
        %v1020 = vsel %vm791, %v611, 0.0
        %1021 = vadd.xlane.f32.xlu0 %v1020
        %v1022 = vpop.xlane.xlu0 %1021
        %v1023 = vsel %vm791, %v612, 0.0
        %1024 = vadd.xlane.f32.xlu0 %v1023
        %v1025 = vpop.xlane.xlu0 %1024
        %v1026 = vsel %vm791, %v613, 0.0
        %1027 = vadd.xlane.f32.xlu0 %v1026
        %v1028 = vpop.xlane.xlu0 %1027
        %v1029 = vsel %vm791, %v614, 0.0
        %1030 = vadd.xlane.f32.xlu0 %v1029
        %v1031 = vpop.xlane.xlu0 %1030
        %v1032 = vsel %vm791, %v615, 0.0
        %1033 = vadd.xlane.f32.xlu0 %v1032
        %v1034 = vpop.xlane.xlu0 %1033
        %v1035 = vsel %vm791, %v616, 0.0
        %1036 = vadd.xlane.f32.xlu0 %v1035
        %v1037 = vpop.xlane.xlu0 %1036
        %v1038 = vsel %vm791, %v617, 0.0
        %1039 = vadd.xlane.f32.xlu0 %v1038
        %v1040 = vpop.xlane.xlu0 %1039
        %v1041 = vsel %vm791, %v618, 0.0
        %1042 = vadd.xlane.f32.xlu0 %v1041
        %v1043 = vpop.xlane.xlu0 %1042
        %v1044 = vsel %vm791, %v619, 0.0
        %1045 = vadd.xlane.f32.xlu0 %v1044
        %v1046 = vpop.xlane.xlu0 %1045
        %v1047 = vsel %vm791, %v620, 0.0
        %1048 = vadd.xlane.f32.xlu0 %v1047
        %v1049 = vpop.xlane.xlu0 %1048
        %v1050 = vsel %vm791, %v621, 0.0
        %1051 = vadd.xlane.f32.xlu0 %v1050
        %v1052 = vpop.xlane.xlu0 %1051
        %v1053 = vsel %vm791, %v622, 0.0
        %1054 = vadd.xlane.f32.xlu0 %v1053
        %v1055 = vpop.xlane.xlu0 %1054
        %v1056 = vsel %vm791, %v623, 0.0
        %1057 = vadd.xlane.f32.xlu0 %v1056
        %v1058 = vpop.xlane.xlu0 %1057
        %v1059 = vsel %vm791, %v624, 0.0
        %1060 = vadd.xlane.f32.xlu0 %v1059
        %v1061 = vpop.xlane.xlu0 %1060
        %v1062 = vsel %vm791, %v625, 0.0
        %1063 = vadd.xlane.f32.xlu0 %v1062
        %v1064 = vpop.xlane.xlu0 %1063
        %v1065 = vsel %vm791, %v626, 0.0
        %1066 = vadd.xlane.f32.xlu0 %v1065
        %v1067 = vpop.xlane.xlu0 %1066
        %v1068 = vsel %vm791, %v627, 0.0
        %1069 = vadd.xlane.f32.xlu0 %v1068
        %v1070 = vpop.xlane.xlu0 %1069
        %v1071 = vsel %vm791, %v628, 0.0
        %1072 = vadd.xlane.f32.xlu0 %v1071
        %v1073 = vpop.xlane.xlu0 %1072
        %v1074 = vsel %vm791, %v629, 0.0
        %1075 = vadd.xlane.f32.xlu0 %v1074
        %v1076 = vpop.xlane.xlu0 %1075
        %v1077 = vsel %vm791, %v630, 0.0
        %1078 = vadd.xlane.f32.xlu0 %v1077
        %v1079 = vpop.xlane.xlu0 %1078
        %v1080 = vsel %vm791, %v631, 0.0
        %1081 = vadd.xlane.f32.xlu0 %v1080
        %v1082 = vpop.xlane.xlu0 %1081
        %v1083 = vsel %vm791, %v632, 0.0
        %1084 = vadd.xlane.f32.xlu0 %v1083
        %v1085 = vpop.xlane.xlu0 %1084
        %v1086 = vsel %vm791, %v633, 0.0
        %1087 = vadd.xlane.f32.xlu0 %v1086
        %v1088 = vpop.xlane.xlu0 %1087
        %v1089 = vsel %vm791, %v634, 0.0
        %1090 = vadd.xlane.f32.xlu0 %v1089
        %v1091 = vpop.xlane.xlu0 %1090
        %v1092 = vsel %vm791, %v635, 0.0
        %1093 = vadd.xlane.f32.xlu0 %v1092
        %v1094 = vpop.xlane.xlu0 %1093
        %v1095 = vsel %vm791, %v636, 0.0
        %1096 = vadd.xlane.f32.xlu0 %v1095
        %v1097 = vpop.xlane.xlu0 %1096
        %v1098 = vsel %vm791, %v637, 0.0
        %1099 = vadd.xlane.f32.xlu0 %v1098
        %v1100 = vpop.xlane.xlu0 %1099
        %v1101 = vsel %vm791, %v638, 0.0
        %1102 = vadd.xlane.f32.xlu0 %v1101
        %v1103 = vpop.xlane.xlu0 %1102
        %v1104 = vsel %vm791, %v639, 0.0
        %1105 = vadd.xlane.f32.xlu0 %v1104
        %v1106 = vpop.xlane.xlu0 %1105
        %v1107 = vsel %vm791, %v640, 0.0
        %1108 = vadd.xlane.f32.xlu0 %v1107
        %v1109 = vpop.xlane.xlu0 %1108
        %v1110 = vsel %vm791, %v641, 0.0
        %1111 = vadd.xlane.f32.xlu0 %v1110
        %v1112 = vpop.xlane.xlu0 %1111
        %v1113 = vsel %vm791, %v642, 0.0
        %1114 = vadd.xlane.f32.xlu0 %v1113
        %v1115 = vpop.xlane.xlu0 %1114
        %v1116 = vsel %vm791, %v643, 0.0
        %1117 = vadd.xlane.f32.xlu0 %v1116
        %v1118 = vpop.xlane.xlu0 %1117
        %v1119 = vsel %vm791, %v644, 0.0
        %1120 = vadd.xlane.f32.xlu0 %v1119
        %v1121 = vpop.xlane.xlu0 %1120
        %v1122 = vsel %vm791, %v645, 0.0
        %1123 = vadd.xlane.f32.xlu0 %v1122
        %v1124 = vpop.xlane.xlu0 %1123
        %v1125 = vsel %vm791, %v646, 0.0
        %1126 = vadd.xlane.f32.xlu0 %v1125
        %v1127 = vpop.xlane.xlu0 %1126
        %v1128 = vsel %vm791, %v647, 0.0
        %1129 = vadd.xlane.f32.xlu0 %v1128
        %v1130 = vpop.xlane.xlu0 %1129
        %v1131 = vsel %vm791, %v648, 0.0
        %1132 = vadd.xlane.f32.xlu0 %v1131
        %v1133 = vpop.xlane.xlu0 %1132
        %v1134 = vsel %vm791, %v649, 0.0
        %1135 = vadd.xlane.f32.xlu0 %v1134
        %v1136 = vpop.xlane.xlu0 %1135
        %v1137 = vsel %vm791, %v650, 0.0
        %1138 = vadd.xlane.f32.xlu0 %v1137
        %v1139 = vpop.xlane.xlu0 %1138
        %v1140 = vsel %vm791, %v651, 0.0
        %1141 = vadd.xlane.f32.xlu0 %v1140
        %v1142 = vpop.xlane.xlu0 %1141
        %v1143 = vsel %vm791, %v652, 0.0
        %1144 = vadd.xlane.f32.xlu0 %v1143
        %v1145 = vpop.xlane.xlu0 %1144
        %v1146 = vsel %vm791, %v653, 0.0
        %1147 = vadd.xlane.f32.xlu0 %v1146
        %v1148 = vpop.xlane.xlu0 %1147
        %v1149 = vsel %vm791, %v654, 0.0
        %1150 = vadd.xlane.f32.xlu0 %v1149
        %v1151 = vpop.xlane.xlu0 %1150
        %v1152 = vsel %vm791, %v655, 0.0
        %1153 = vadd.xlane.f32.xlu0 %v1152
        %v1154 = vpop.xlane.xlu0 %1153
        %v1155 = vsel %vm791, %v656, 0.0
        %1156 = vadd.xlane.f32.xlu0 %v1155
        %v1157 = vpop.xlane.xlu0 %1156
        %v1158 = vsel %vm791, %v657, 0.0
        %1159 = vadd.xlane.f32.xlu0 %v1158
        %v1160 = vpop.xlane.xlu0 %1159
        %v1161 = vsel %vm791, %v658, 0.0
        %1162 = vadd.xlane.f32.xlu0 %v1161
        %v1163 = vpop.xlane.xlu0 %1162
        %v1164 = vsel %vm791, %v659, 0.0
        %1165 = vadd.xlane.f32.xlu0 %v1164
        %v1166 = vpop.xlane.xlu0 %1165
        %v1167 = vsel %vm791, %v660, 0.0
        %1168 = vadd.xlane.f32.xlu0 %v1167
        %v1169 = vpop.xlane.xlu0 %1168
        %v1170 = vsel %vm791, %v661, 0.0
        %1171 = vadd.xlane.f32.xlu0 %v1170
        %v1172 = vpop.xlane.xlu0 %1171
        %v1173 = vsel %vm791, %v662, 0.0
        %1174 = vadd.xlane.f32.xlu0 %v1173
        %v1175 = vpop.xlane.xlu0 %1174
        %v1176 = vsel %vm791, %v663, 0.0
        %1177 = vadd.xlane.f32.xlu0 %v1176
        %v1178 = vpop.xlane.xlu0 %1177
        %v1179 = vsel %vm791, %v664, 0.0
        %1180 = vadd.xlane.f32.xlu0 %v1179
        %v1181 = vpop.xlane.xlu0 %1180
        %v1182 = vsel %vm791, %v665, 0.0
        %1183 = vadd.xlane.f32.xlu0 %v1182
        %v1184 = vpop.xlane.xlu0 %1183
        %v1185 = vsel %vm791, %v666, 0.0
        %1186 = vadd.xlane.f32.xlu0 %v1185
        %v1187 = vpop.xlane.xlu0 %1186
        %v1188 = vsel %vm791, %v667, 0.0
        %1189 = vadd.xlane.f32.xlu0 %v1188
        %v1190 = vpop.xlane.xlu0 %1189
        %v1191 = vsel %vm791, %v668, 0.0
        %1192 = vadd.xlane.f32.xlu0 %v1191
        %v1193 = vpop.xlane.xlu0 %1192
        %v1194 = vsel %vm791, %v669, 0.0
        %1195 = vadd.xlane.f32.xlu0 %v1194
        %v1196 = vpop.xlane.xlu0 %1195
        %v1197 = vsel %vm791, %v670, 0.0
        %1198 = vadd.xlane.f32.xlu0 %v1197
        %v1199 = vpop.xlane.xlu0 %1198
        %v1200 = vsel %vm791, %v671, 0.0
        %1201 = vadd.xlane.f32.xlu0 %v1200
        %v1202 = vpop.xlane.xlu0 %1201
        %v1203 = vsel %vm791, %v672, 0.0
        %1204 = vadd.xlane.f32.xlu0 %v1203
        %v1205 = vpop.xlane.xlu0 %1204
        %v1206 = vsel %vm791, %v673, 0.0
        %1207 = vadd.xlane.f32.xlu0 %v1206
        %v1208 = vpop.xlane.xlu0 %1207
        %v1209 = vsel %vm791, %v674, 0.0
        %1210 = vadd.xlane.f32.xlu0 %v1209
        %v1211 = vpop.xlane.xlu0 %1210
        %v1212 = vsel %vm791, %v675, 0.0
        %1213 = vadd.xlane.f32.xlu0 %v1212
        %v1214 = vpop.xlane.xlu0 %1213
        %v1215 = vsel %vm791, %v676, 0.0
        %1216 = vadd.xlane.f32.xlu0 %v1215
        %v1217 = vpop.xlane.xlu0 %1216
        %v1218 = vsel %vm791, %v677, 0.0
        %1219 = vadd.xlane.f32.xlu0 %v1218
        %v1220 = vpop.xlane.xlu0 %1219
        %v1221 = vsel %vm791, %v678, 0.0
        %1222 = vadd.xlane.f32.xlu0 %v1221
        %v1223 = vpop.xlane.xlu0 %1222
        %v1224 = vsel %vm791, %v679, 0.0
        %1225 = vadd.xlane.f32.xlu0 %v1224
        %v1226 = vpop.xlane.xlu0 %1225
        %v1227 = vsel %vm791, %v680, 0.0
        %1228 = vadd.xlane.f32.xlu0 %v1227
        %v1229 = vpop.xlane.xlu0 %1228
        %v1230 = vsel %vm791, %v681, 0.0
        %1231 = vadd.xlane.f32.xlu0 %v1230
        %v1232 = vpop.xlane.xlu0 %1231
        %v1233 = vsel %vm791, %v682, 0.0
        %1234 = vadd.xlane.f32.xlu0 %v1233
        %v1235 = vpop.xlane.xlu0 %1234
        %v1236 = vsel %vm791, %v683, 0.0
        %1237 = vadd.xlane.f32.xlu0 %v1236
        %v1238 = vpop.xlane.xlu0 %1237
        %v1239 = vsel %vm791, %v684, 0.0
        %1240 = vadd.xlane.f32.xlu0 %v1239
        %v1241 = vpop.xlane.xlu0 %1240
        %v1242 = vsel %vm791, %v685, 0.0
        %1243 = vadd.xlane.f32.xlu0 %v1242
        %v1244 = vpop.xlane.xlu0 %1243
        %v1245 = vsel %vm791, %v686, 0.0
        %1246 = vadd.xlane.f32.xlu0 %v1245
        %v1247 = vpop.xlane.xlu0 %1246
        %v1248 = vsel %vm791, %v687, 0.0
        %1249 = vadd.xlane.f32.xlu0 %v1248
        %v1250 = vpop.xlane.xlu0 %1249
        %v1251 = vsel %vm791, %v688, 0.0
        %1252 = vadd.xlane.f32.xlu0 %v1251
        %v1253 = vpop.xlane.xlu0 %1252
        %v1254 = vsel %vm791, %v689, 0.0
        %1255 = vadd.xlane.f32.xlu0 %v1254
        %v1256 = vpop.xlane.xlu0 %1255
        %v1257 = vsel %vm791, %v690, 0.0
        %1258 = vadd.xlane.f32.xlu0 %v1257
        %v1259 = vpop.xlane.xlu0 %1258
        %v1260 = vsel %vm791, %v691, 0.0
        %1261 = vadd.xlane.f32.xlu0 %v1260
        %v1262 = vpop.xlane.xlu0 %1261
        %v1263 = vsel %vm791, %v692, 0.0
        %1264 = vadd.xlane.f32.xlu0 %v1263
        %v1265 = vpop.xlane.xlu0 %1264
        %v1266 = vsel %vm791, %v693, 0.0
        %1267 = vadd.xlane.f32.xlu0 %v1266
        %v1268 = vpop.xlane.xlu0 %1267
        %v1269 = vsel %vm791, %v694, 0.0
        %1270 = vadd.xlane.f32.xlu0 %v1269
        %v1271 = vpop.xlane.xlu0 %1270
        %v1272 = vsel %vm791, %v695, 0.0
        %1273 = vadd.xlane.f32.xlu0 %v1272
        %v1274 = vpop.xlane.xlu0 %1273
        %v1275 = vsel %vm791, %v696, 0.0
        %1276 = vadd.xlane.f32.xlu0 %v1275
        %v1277 = vpop.xlane.xlu0 %1276
        %v1278 = vsel %vm791, %v697, 0.0
        %1279 = vadd.xlane.f32.xlu0 %v1278
        %v1280 = vpop.xlane.xlu0 %1279
        %v1281 = vsel %vm791, %v698, 0.0
        %1282 = vadd.xlane.f32.xlu0 %v1281
        %v1283 = vpop.xlane.xlu0 %1282
        %v1284 = vsel %vm791, %v699, 0.0
        %1285 = vadd.xlane.f32.xlu0 %v1284
        %v1286 = vpop.xlane.xlu0 %1285
        %v1287 = vsel %vm791, %v700, 0.0
        %1288 = vadd.xlane.f32.xlu0 %v1287
        %v1289 = vpop.xlane.xlu0 %1288
        %v1290 = vsel %vm791, %v701, 0.0
        %1291 = vadd.xlane.f32.xlu0 %v1290
        %v1292 = vpop.xlane.xlu0 %1291
        %v1293 = vsel %vm791, %v702, 0.0
        %1294 = vadd.xlane.f32.xlu0 %v1293
        %v1295 = vpop.xlane.xlu0 %1294
        %v1296 = vsel %vm791, %v703, 0.0
        %1297 = vadd.xlane.f32.xlu0 %v1296
        %v1298 = vpop.xlane.xlu0 %1297
        %v1299 = vsel %vm791, %v704, 0.0
        %1300 = vadd.xlane.f32.xlu0 %v1299
        %v1301 = vpop.xlane.xlu0 %1300
        %v1302 = vsel %vm791, %v705, 0.0
        %1303 = vadd.xlane.f32.xlu0 %v1302
        %v1304 = vpop.xlane.xlu0 %1303
        %v1305 = vsel %vm791, %v706, 0.0
        %1306 = vadd.xlane.f32.xlu0 %v1305
        %v1307 = vpop.xlane.xlu0 %1306
        %v1308 = vsel %vm791, %v707, 0.0
        %1309 = vadd.xlane.f32.xlu0 %v1308
        %v1310 = vpop.xlane.xlu0 %1309
        %v1311 = vsel %vm791, %v708, 0.0
        %1312 = vadd.xlane.f32.xlu0 %v1311
        %v1313 = vpop.xlane.xlu0 %1312
        %v1314 = vsel %vm791, %v709, 0.0
        %1315 = vadd.xlane.f32.xlu0 %v1314
        %v1316 = vpop.xlane.xlu0 %1315
        %v1317 = vsel %vm791, %v710, 0.0
        %1318 = vadd.xlane.f32.xlu0 %v1317
        %v1319 = vpop.xlane.xlu0 %1318
        %v1320 = vsel %vm791, %v711, 0.0
        %1321 = vadd.xlane.f32.xlu0 %v1320
        %v1322 = vpop.xlane.xlu0 %1321
        %v1323 = vsel %vm791, %v712, 0.0
        %1324 = vadd.xlane.f32.xlu0 %v1323
        %v1325 = vpop.xlane.xlu0 %1324
        %v1326 = vsel %vm791, %v713, 0.0
        %1327 = vadd.xlane.f32.xlu0 %v1326
        %v1328 = vpop.xlane.xlu0 %1327
        %v1329 = vsel %vm791, %v714, 0.0
        %1330 = vadd.xlane.f32.xlu0 %v1329
        %v1331 = vpop.xlane.xlu0 %1330
        %v1332 = vsel %vm791, %v715, 0.0
        %1333 = vadd.xlane.f32.xlu0 %v1332
        %v1334 = vpop.xlane.xlu0 %1333
        %v1335 = vsel %vm791, %v716, 0.0
        %1336 = vadd.xlane.f32.xlu0 %v1335
        %v1337 = vpop.xlane.xlu0 %1336
        %v1338 = vsel %vm791, %v717, 0.0
        %1339 = vadd.xlane.f32.xlu0 %v1338
        %v1340 = vpop.xlane.xlu0 %1339
        %v1341 = vsel %vm791, %v718, 0.0
        %1342 = vadd.xlane.f32.xlu0 %v1341
        %v1343 = vpop.xlane.xlu0 %1342
        %v1344 = vsel %vm791, %v719, 0.0
        %1345 = vadd.xlane.f32.xlu0 %v1344
        %v1346 = vpop.xlane.xlu0 %1345
        %v1347 = vsel %vm791, %v720, 0.0
        %1348 = vadd.xlane.f32.xlu0 %v1347
        %v1349 = vpop.xlane.xlu0 %1348
        %v1350 = vsel %vm791, %v721, 0.0
        %1351 = vadd.xlane.f32.xlu0 %v1350
        %v1352 = vpop.xlane.xlu0 %1351
        %v1353 = vsel %vm791, %v722, 0.0
        %1354 = vadd.xlane.f32.xlu0 %v1353
        %v1355 = vpop.xlane.xlu0 %1354
        %v1356 = vsel %vm791, %v723, 0.0
        %1357 = vadd.xlane.f32.xlu0 %v1356
        %v1358 = vpop.xlane.xlu0 %1357
        %v1359 = vsel %vm791, %v724, 0.0
        %1360 = vadd.xlane.f32.xlu0 %v1359
        %v1361 = vpop.xlane.xlu0 %1360
        %v1362 = vsel %vm791, %v725, 0.0
        %1363 = vadd.xlane.f32.xlu0 %v1362
        %v1364 = vpop.xlane.xlu0 %1363
        %v1365 = vsel %vm791, %v726, 0.0
        %1366 = vadd.xlane.f32.xlu0 %v1365
        %v1367 = vpop.xlane.xlu0 %1366
        %v1368 = vsel %vm791, %v727, 0.0
        %1369 = vadd.xlane.f32.xlu0 %v1368
        %v1370 = vpop.xlane.xlu0 %1369
        %v1371 = vsel %vm791, %v728, 0.0
        %1372 = vadd.xlane.f32.xlu0 %v1371
        %v1373 = vpop.xlane.xlu0 %1372
        %v1374 = vsel %vm791, %v729, 0.0
        %1375 = vadd.xlane.f32.xlu0 %v1374
        %v1376 = vpop.xlane.xlu0 %1375
        %v1377 = vsel %vm791, %v730, 0.0
        %1378 = vadd.xlane.f32.xlu0 %v1377
        %v1379 = vpop.xlane.xlu0 %1378
        %v1380 = vsel %vm791, %v731, 0.0
        %1381 = vadd.xlane.f32.xlu0 %v1380
        %v1382 = vpop.xlane.xlu0 %1381
        %v1383 = vsel %vm791, %v732, 0.0
        %1384 = vadd.xlane.f32.xlu0 %v1383
        %v1385 = vpop.xlane.xlu0 %1384
        %v1386 = vsel %vm791, %v733, 0.0
        %1387 = vadd.xlane.f32.xlu0 %v1386
        %v1388 = vpop.xlane.xlu0 %1387
        %v1389 = vsel %vm791, %v734, 0.0
        %1390 = vadd.xlane.f32.xlu0 %v1389
        %v1391 = vpop.xlane.xlu0 %1390
        %v1392 = vsel %vm791, %v735, 0.0
        %1393 = vadd.xlane.f32.xlu0 %v1392
        %v1394 = vpop.xlane.xlu0 %1393
        %v1395 = vsel %vm791, %v736, 0.0
        %1396 = vadd.xlane.f32.xlu0 %v1395
        %v1397 = vpop.xlane.xlu0 %1396
        %v1398 = vsel %vm791, %v737, 0.0
        %1399 = vadd.xlane.f32.xlu0 %v1398
        %v1400 = vpop.xlane.xlu0 %1399
        %v1401 = vsel %vm791, %v738, 0.0
        %1402 = vadd.xlane.f32.xlu0 %v1401
        %v1403 = vpop.xlane.xlu0 %1402
        %v1404 = vsel %vm791, %v739, 0.0
        %1405 = vadd.xlane.f32.xlu0 %v1404
        %v1406 = vpop.xlane.xlu0 %1405
        %v1407 = vsel %vm791, %v740, 0.0
        %1408 = vadd.xlane.f32.xlu0 %v1407
        %v1409 = vpop.xlane.xlu0 %1408
        %v1410 = vsel %vm791, %v741, 0.0
        %1411 = vadd.xlane.f32.xlu0 %v1410
        %v1412 = vpop.xlane.xlu0 %1411
        %v1413 = vsel %vm791, %v742, 0.0
        %1414 = vadd.xlane.f32.xlu0 %v1413
        %v1415 = vpop.xlane.xlu0 %1414
        %v1416 = vsel %vm791, %v743, 0.0
        %1417 = vadd.xlane.f32.xlu0 %v1416
        %v1418 = vpop.xlane.xlu0 %1417
        %v1419 = vsel %vm791, %v744, 0.0
        %1420 = vadd.xlane.f32.xlu0 %v1419
        %v1421 = vpop.xlane.xlu0 %1420
        %v1422 = vsel %vm791, %v745, 0.0
        %1423 = vadd.xlane.f32.xlu0 %v1422
        %v1424 = vpop.xlane.xlu0 %1423
        %v1425 = vsel %vm791, %v746, 0.0
        %1426 = vadd.xlane.f32.xlu0 %v1425
        %v1427 = vpop.xlane.xlu0 %1426
        %v1428 = vsel %vm791, %v747, 0.0
        %1429 = vadd.xlane.f32.xlu0 %v1428
        %v1430 = vpop.xlane.xlu0 %1429
        %v1431 = vsel %vm791, %v748, 0.0
        %1432 = vadd.xlane.f32.xlu0 %v1431
        %v1433 = vpop.xlane.xlu0 %1432
        %v1434 = vsel %vm791, %v749, 0.0
        %1435 = vadd.xlane.f32.xlu0 %v1434
        %v1436 = vpop.xlane.xlu0 %1435
        %v1437 = vsel %vm791, %v750, 0.0
        %1438 = vadd.xlane.f32.xlu0 %v1437
        %v1439 = vpop.xlane.xlu0 %1438
        %v1440 = vsel %vm791, %v751, 0.0
        %1441 = vadd.xlane.f32.xlu0 %v1440
        %v1442 = vpop.xlane.xlu0 %1441
        %v1443 = vsel %vm791, %v752, 0.0
        %1444 = vadd.xlane.f32.xlu0 %v1443
        %v1445 = vpop.xlane.xlu0 %1444
        %v1446 = vsel %vm791, %v753, 0.0
        %1447 = vadd.xlane.f32.xlu0 %v1446
        %v1448 = vpop.xlane.xlu0 %1447
        %v1449 = vsel %vm791, %v754, 0.0
        %1450 = vadd.xlane.f32.xlu0 %v1449
        %v1451 = vpop.xlane.xlu0 %1450
        %v1452 = vsel %vm791, %v755, 0.0
        %1453 = vadd.xlane.f32.xlu0 %v1452
        %v1454 = vpop.xlane.xlu0 %1453
        %v1455 = vsel %vm791, %v756, 0.0
        %1456 = vadd.xlane.f32.xlu0 %v1455
        %v1457 = vpop.xlane.xlu0 %1456
        %v1458 = vsel %vm791, %v757, 0.0
        %1459 = vadd.xlane.f32.xlu0 %v1458
        %v1460 = vpop.xlane.xlu0 %1459
        %v1461 = vsel %vm791, %v758, 0.0
        %1462 = vadd.xlane.f32.xlu0 %v1461
        %v1463 = vpop.xlane.xlu0 %1462
        %v1464 = vsel %vm791, %v759, 0.0
        %1465 = vadd.xlane.f32.xlu0 %v1464
        %v1466 = vpop.xlane.xlu0 %1465
        %v1467 = vsel %vm791, %v760, 0.0
        %1468 = vadd.xlane.f32.xlu0 %v1467
        %v1469 = vpop.xlane.xlu0 %1468
        %v1470 = vsel %vm791, %v761, 0.0
        %1471 = vadd.xlane.f32.xlu0 %v1470
        %v1472 = vpop.xlane.xlu0 %1471
        %v1473 = vsel %vm791, %v762, 0.0
        %1474 = vadd.xlane.f32.xlu0 %v1473
        %v1475 = vpop.xlane.xlu0 %1474
        %v1476 = vsel %vm791, %v763, 0.0
        %1477 = vadd.xlane.f32.xlu0 %v1476
        %v1478 = vpop.xlane.xlu0 %1477
        %v1479 = vsel %vm791, %v764, 0.0
        %1480 = vadd.xlane.f32.xlu0 %v1479
        %v1481 = vpop.xlane.xlu0 %1480
        %v1482 = vsel %vm791, %v765, 0.0
        %1483 = vadd.xlane.f32.xlu0 %v1482
        %v1484 = vpop.xlane.xlu0 %1483
        %v1485 = vsel %vm791, %v766, 0.0
        %1486 = vadd.xlane.f32.xlu0 %v1485
        %v1487 = vpop.xlane.xlu0 %1486
        %v1488 = vsel %vm791, %v767, 0.0
        %1489 = vadd.xlane.f32.xlu0 %v1488
        %v1490 = vpop.xlane.xlu0 %1489
        %v1491 = vsel %vm791, %v768, 0.0
        %1492 = vadd.xlane.f32.xlu0 %v1491
        %v1493 = vpop.xlane.xlu0 %1492
        %v1494 = vsel %vm791, %v769, 0.0
        %1495 = vadd.xlane.f32.xlu0 %v1494
        %v1496 = vpop.xlane.xlu0 %1495
        %v1497 = vsel %vm791, %v770, 0.0
        %1498 = vadd.xlane.f32.xlu0 %v1497
        %v1499 = vpop.xlane.xlu0 %1498
        %v1500 = vsel %vm791, %v771, 0.0
        %1501 = vadd.xlane.f32.xlu0 %v1500
        %v1502 = vpop.xlane.xlu0 %1501
        %v1503 = vsel %vm791, %v772, 0.0
        %1504 = vadd.xlane.f32.xlu0 %v1503
        %v1505 = vpop.xlane.xlu0 %1504
        %v1506 = vsel %vm791, %v773, 0.0
        %1507 = vadd.xlane.f32.xlu0 %v1506
        %v1508 = vpop.xlane.xlu0 %1507
        %v1509 = vsel %vm791, %v774, 0.0
        %1510 = vadd.xlane.f32.xlu0 %v1509
        %v1511 = vpop.xlane.xlu0 %1510
        %v1512 = vsel %vm791, %v775, 0.0
        %1513 = vadd.xlane.f32.xlu0 %v1512
        %v1514 = vpop.xlane.xlu0 %1513
        %v1515 = vsel %vm791, %v776, 0.0
        %1516 = vadd.xlane.f32.xlu0 %v1515
        %v1517 = vpop.xlane.xlu0 %1516
        %v1518 = vsel %vm791, %v777, 0.0
        %1519 = vadd.xlane.f32.xlu0 %v1518
        %v1520 = vpop.xlane.xlu0 %1519
        %v1521 = vsel %vm791, %v778, 0.0
        %1522 = vadd.xlane.f32.xlu0 %v1521
        %v1523 = vpop.xlane.xlu0 %1522
        %v1524 = vsel %vm791, %v779, 0.0
        %1525 = vadd.xlane.f32.xlu0 %v1524
        %v1526 = vpop.xlane.xlu0 %1525
        %v1527 = vsel %vm791, %v780, 0.0
        %1528 = vadd.xlane.f32.xlu0 %v1527
        %v1529 = vpop.xlane.xlu0 %1528
        %v1530 = vsel %vm791, %v781, 0.0
        %1531 = vadd.xlane.f32.xlu0 %v1530
        %v1532 = vpop.xlane.xlu0 %1531
        %v1533 = vsel %vm791, %v782, 0.0
        %1534 = vadd.xlane.f32.xlu0 %v1533
        %v1535 = vpop.xlane.xlu0 %1534
        %v1536 = vsel %vm791, %v783, 0.0
        %1537 = vadd.xlane.f32.xlu0 %v1536
        %v1538 = vpop.xlane.xlu0 %1537
        %v1539 = vsel %vm791, %v784, 0.0
        %1540 = vadd.xlane.f32.xlu0 %v1539
        %v1541 = vpop.xlane.xlu0 %1540
        %v1542 = vsel %vm791, %v785, 0.0
        %1543 = vadd.xlane.f32.xlu0 %v1542
        %v1544 = vpop.xlane.xlu0 %1543
        %v1545 = vsel %vm791, %v786, 0.0
        %1546 = vadd.xlane.f32.xlu0 %v1545
        %v1547 = vpop.xlane.xlu0 %1546
        %v1548 = vsel %vm791, %v787, 0.0
        %1549 = vadd.xlane.f32.xlu0 %v1548
        %v1550 = vpop.xlane.xlu0 %1549
        %v1551 = vsel %vm791, %v788, 0.0
        %1552 = vadd.xlane.f32.xlu0 %v1551
        %v1553 = vpop.xlane.xlu0 %1552
        %v1554 = vsel %vm791, %v789, 0.0
        %1555 = vadd.xlane.f32.xlu0 %v1554
        %v1556 = vpop.xlane.xlu0 %1555
        %v1557 = vsel %vm791, %v790, 0.0
        %1558 = vadd.xlane.f32.xlu0 %v1557
        %v1559 = vpop.xlane.xlu0 %1558
        %vm1560 = vcmask 7168
        %1561 = vst.msk [vmem:[%s172] sm:$0xff] %vm1560, %v794
        %1562 = vst.msk [vmem:[%s172 + $0x8] sm:$0xff] %vm1560, %v797
        %1563 = vst.msk [vmem:[%s172 + $0x10] sm:$0xff] %vm1560, %v800
        %1564 = vst.msk [vmem:[%s172 + $0x18] sm:$0xff] %vm1560, %v803
        %1565 = vst.msk [vmem:[%s172 + $0x20] sm:$0xff] %vm1560, %v806
        %1566 = vst.msk [vmem:[%s172 + $0x28] sm:$0xff] %vm1560, %v809
        %1567 = vst.msk [vmem:[%s172 + $0x30] sm:$0xff] %vm1560, %v812
        %1568 = vst.msk [vmem:[%s172 + $0x38] sm:$0xff] %vm1560, %v815
        %1569 = vst.msk [vmem:[%s172 + $0x40] sm:$0xff] %vm1560, %v818
        %1570 = vst.msk [vmem:[%s172 + $0x48] sm:$0xff] %vm1560, %v821
        %1571 = vst.msk [vmem:[%s172 + $0x50] sm:$0xff] %vm1560, %v824
        %1572 = vst.msk [vmem:[%s172 + $0x58] sm:$0xff] %vm1560, %v827
        %1573 = vst.msk [vmem:[%s172 + $0x60] sm:$0xff] %vm1560, %v830
        %1574 = vst.msk [vmem:[%s172 + $0x68] sm:$0xff] %vm1560, %v833
        %1575 = vst.msk [vmem:[%s172 + $0x70] sm:$0xff] %vm1560, %v836
        %1576 = vst.msk [vmem:[%s172 + $0x78] sm:$0xff] %vm1560, %v839
        %1577 = vst.msk [vmem:[%s172 + $0x80] sm:$0xff] %vm1560, %v842
        %1578 = vst.msk [vmem:[%s172 + $0x88] sm:$0xff] %vm1560, %v845
        %1579 = vst.msk [vmem:[%s172 + $0x90] sm:$0xff] %vm1560, %v848
        %1580 = vst.msk [vmem:[%s172 + $0x98] sm:$0xff] %vm1560, %v851
        %1581 = vst.msk [vmem:[%s172 + $0xa0] sm:$0xff] %vm1560, %v854
        %1582 = vst.msk [vmem:[%s172 + $0xa8] sm:$0xff] %vm1560, %v857
        %1583 = vst.msk [vmem:[%s172 + $0xb0] sm:$0xff] %vm1560, %v860
        %1584 = vst.msk [vmem:[%s172 + $0xb8] sm:$0xff] %vm1560, %v863
        %1585 = vst.msk [vmem:[%s172 + $0xc0] sm:$0xff] %vm1560, %v866
        %1586 = vst.msk [vmem:[%s172 + $0xc8] sm:$0xff] %vm1560, %v869
        %1587 = vst.msk [vmem:[%s172 + $0xd0] sm:$0xff] %vm1560, %v872
        %1588 = vst.msk [vmem:[%s172 + $0xd8] sm:$0xff] %vm1560, %v875
        %1589 = vst.msk [vmem:[%s172 + $0xe0] sm:$0xff] %vm1560, %v878
        %1590 = vst.msk [vmem:[%s172 + $0xe8] sm:$0xff] %vm1560, %v881
        %1591 = vst.msk [vmem:[%s172 + $0xf0] sm:$0xff] %vm1560, %v884
        %1592 = vst.msk [vmem:[%s172 + $0xf8] sm:$0xff] %vm1560, %v887
        %1593 = vst.msk [vmem:[%s172 + $0x100] sm:$0xff] %vm1560, %v890
        %1594 = vst.msk [vmem:[%s172 + $0x108] sm:$0xff] %vm1560, %v893
        %1595 = vst.msk [vmem:[%s172 + $0x110] sm:$0xff] %vm1560, %v896
        %1596 = vst.msk [vmem:[%s172 + $0x118] sm:$0xff] %vm1560, %v899
        %1597 = vst.msk [vmem:[%s172 + $0x120] sm:$0xff] %vm1560, %v902
        %1598 = vst.msk [vmem:[%s172 + $0x128] sm:$0xff] %vm1560, %v905
        %1599 = vst.msk [vmem:[%s172 + $0x130] sm:$0xff] %vm1560, %v908
        %1600 = vst.msk [vmem:[%s172 + $0x138] sm:$0xff] %vm1560, %v911
        %1601 = vst.msk [vmem:[%s172 + $0x140] sm:$0xff] %vm1560, %v914
        %1602 = vst.msk [vmem:[%s172 + $0x148] sm:$0xff] %vm1560, %v917
        %1603 = vst.msk [vmem:[%s172 + $0x150] sm:$0xff] %vm1560, %v920
        %1604 = vst.msk [vmem:[%s172 + $0x158] sm:$0xff] %vm1560, %v923
        %1605 = vst.msk [vmem:[%s172 + $0x160] sm:$0xff] %vm1560, %v926
        %1606 = vst.msk [vmem:[%s172 + $0x168] sm:$0xff] %vm1560, %v929
        %1607 = vst.msk [vmem:[%s172 + $0x170] sm:$0xff] %vm1560, %v932
        %1608 = vst.msk [vmem:[%s172 + $0x178] sm:$0xff] %vm1560, %v935
        %1609 = vst.msk [vmem:[%s172 + $0x180] sm:$0xff] %vm1560, %v938
        %1610 = vst.msk [vmem:[%s172 + $0x188] sm:$0xff] %vm1560, %v941
        %1611 = vst.msk [vmem:[%s172 + $0x190] sm:$0xff] %vm1560, %v944
        %1612 = vst.msk [vmem:[%s172 + $0x198] sm:$0xff] %vm1560, %v947
        %1613 = vst.msk [vmem:[%s172 + $0x1a0] sm:$0xff] %vm1560, %v950
        %1614 = vst.msk [vmem:[%s172 + $0x1a8] sm:$0xff] %vm1560, %v953
        %1615 = vst.msk [vmem:[%s172 + $0x1b0] sm:$0xff] %vm1560, %v956
        %1616 = vst.msk [vmem:[%s172 + $0x1b8] sm:$0xff] %vm1560, %v959
        %1617 = vst.msk [vmem:[%s172 + $0x1c0] sm:$0xff] %vm1560, %v962
        %1618 = vst.msk [vmem:[%s172 + $0x1c8] sm:$0xff] %vm1560, %v965
        %1619 = vst.msk [vmem:[%s172 + $0x1d0] sm:$0xff] %vm1560, %v968
        %1620 = vst.msk [vmem:[%s172 + $0x1d8] sm:$0xff] %vm1560, %v971
        %1621 = vst.msk [vmem:[%s172 + $0x1e0] sm:$0xff] %vm1560, %v974
        %1622 = vst.msk [vmem:[%s172 + $0x1e8] sm:$0xff] %vm1560, %v977
        %1623 = vst.msk [vmem:[%s172 + $0x1f0] sm:$0xff] %vm1560, %v980
        %1624 = vst.msk [vmem:[%s172 + $0x1f8] sm:$0xff] %vm1560, %v983
        %1625 = vst.msk [vmem:[%s172 + $0x200] sm:$0xff] %vm1560, %v986
        %1626 = vst.msk [vmem:[%s172 + $0x208] sm:$0xff] %vm1560, %v989
        %1627 = vst.msk [vmem:[%s172 + $0x210] sm:$0xff] %vm1560, %v992
        %1628 = vst.msk [vmem:[%s172 + $0x218] sm:$0xff] %vm1560, %v995
        %1629 = vst.msk [vmem:[%s172 + $0x220] sm:$0xff] %vm1560, %v998
        %1630 = vst.msk [vmem:[%s172 + $0x228] sm:$0xff] %vm1560, %v1001
        %1631 = vst.msk [vmem:[%s172 + $0x230] sm:$0xff] %vm1560, %v1004
        %1632 = vst.msk [vmem:[%s172 + $0x238] sm:$0xff] %vm1560, %v1007
        %1633 = vst.msk [vmem:[%s172 + $0x240] sm:$0xff] %vm1560, %v1010
        %1634 = vst.msk [vmem:[%s172 + $0x248] sm:$0xff] %vm1560, %v1013
        %1635 = vst.msk [vmem:[%s172 + $0x250] sm:$0xff] %vm1560, %v1016
        %1636 = vst.msk [vmem:[%s172 + $0x258] sm:$0xff] %vm1560, %v1019
        %1637 = vst.msk [vmem:[%s172 + $0x260] sm:$0xff] %vm1560, %v1022
        %1638 = vst.msk [vmem:[%s172 + $0x268] sm:$0xff] %vm1560, %v1025
        %1639 = vst.msk [vmem:[%s172 + $0x270] sm:$0xff] %vm1560, %v1028
        %1640 = vst.msk [vmem:[%s172 + $0x278] sm:$0xff] %vm1560, %v1031
        %1641 = vst.msk [vmem:[%s172 + $0x280] sm:$0xff] %vm1560, %v1034
        %1642 = vst.msk [vmem:[%s172 + $0x288] sm:$0xff] %vm1560, %v1037
        %1643 = vst.msk [vmem:[%s172 + $0x290] sm:$0xff] %vm1560, %v1040
        %1644 = vst.msk [vmem:[%s172 + $0x298] sm:$0xff] %vm1560, %v1043
        %1645 = vst.msk [vmem:[%s172 + $0x2a0] sm:$0xff] %vm1560, %v1046
        %1646 = vst.msk [vmem:[%s172 + $0x2a8] sm:$0xff] %vm1560, %v1049
        %1647 = vst.msk [vmem:[%s172 + $0x2b0] sm:$0xff] %vm1560, %v1052
        %1648 = vst.msk [vmem:[%s172 + $0x2b8] sm:$0xff] %vm1560, %v1055
        %1649 = vst.msk [vmem:[%s172 + $0x2c0] sm:$0xff] %vm1560, %v1058
        %1650 = vst.msk [vmem:[%s172 + $0x2c8] sm:$0xff] %vm1560, %v1061
        %1651 = vst.msk [vmem:[%s172 + $0x2d0] sm:$0xff] %vm1560, %v1064
        %1652 = vst.msk [vmem:[%s172 + $0x2d8] sm:$0xff] %vm1560, %v1067
        %1653 = vst.msk [vmem:[%s172 + $0x2e0] sm:$0xff] %vm1560, %v1070
        %1654 = vst.msk [vmem:[%s172 + $0x2e8] sm:$0xff] %vm1560, %v1073
        %1655 = vst.msk [vmem:[%s172 + $0x2f0] sm:$0xff] %vm1560, %v1076
        %1656 = vst.msk [vmem:[%s172 + $0x2f8] sm:$0xff] %vm1560, %v1079
        %1657 = vst.msk [vmem:[%s172 + $0x300] sm:$0xff] %vm1560, %v1082
        %1658 = vst.msk [vmem:[%s172 + $0x308] sm:$0xff] %vm1560, %v1085
        %1659 = vst.msk [vmem:[%s172 + $0x310] sm:$0xff] %vm1560, %v1088
        %1660 = vst.msk [vmem:[%s172 + $0x318] sm:$0xff] %vm1560, %v1091
        %1661 = vst.msk [vmem:[%s172 + $0x320] sm:$0xff] %vm1560, %v1094
        %1662 = vst.msk [vmem:[%s172 + $0x328] sm:$0xff] %vm1560, %v1097
        %1663 = vst.msk [vmem:[%s172 + $0x330] sm:$0xff] %vm1560, %v1100
        %1664 = vst.msk [vmem:[%s172 + $0x338] sm:$0xff] %vm1560, %v1103
        %1665 = vst.msk [vmem:[%s172 + $0x340] sm:$0xff] %vm1560, %v1106
        %1666 = vst.msk [vmem:[%s172 + $0x348] sm:$0xff] %vm1560, %v1109
        %1667 = vst.msk [vmem:[%s172 + $0x350] sm:$0xff] %vm1560, %v1112
        %1668 = vst.msk [vmem:[%s172 + $0x358] sm:$0xff] %vm1560, %v1115
        %1669 = vst.msk [vmem:[%s172 + $0x360] sm:$0xff] %vm1560, %v1118
        %1670 = vst.msk [vmem:[%s172 + $0x368] sm:$0xff] %vm1560, %v1121
        %1671 = vst.msk [vmem:[%s172 + $0x370] sm:$0xff] %vm1560, %v1124
        %1672 = vst.msk [vmem:[%s172 + $0x378] sm:$0xff] %vm1560, %v1127
        %1673 = vst.msk [vmem:[%s172 + $0x380] sm:$0xff] %vm1560, %v1130
        %1674 = vst.msk [vmem:[%s172 + $0x388] sm:$0xff] %vm1560, %v1133
        %1675 = vst.msk [vmem:[%s172 + $0x390] sm:$0xff] %vm1560, %v1136
        %1676 = vst.msk [vmem:[%s172 + $0x398] sm:$0xff] %vm1560, %v1139
        %1677 = vst.msk [vmem:[%s172 + $0x3a0] sm:$0xff] %vm1560, %v1142
        %1678 = vst.msk [vmem:[%s172 + $0x3a8] sm:$0xff] %vm1560, %v1145
        %1679 = vst.msk [vmem:[%s172 + $0x3b0] sm:$0xff] %vm1560, %v1148
        %1680 = vst.msk [vmem:[%s172 + $0x3b8] sm:$0xff] %vm1560, %v1151
        %1681 = vst.msk [vmem:[%s172 + $0x3c0] sm:$0xff] %vm1560, %v1154
        %1682 = vst.msk [vmem:[%s172 + $0x3c8] sm:$0xff] %vm1560, %v1157
        %1683 = vst.msk [vmem:[%s172 + $0x3d0] sm:$0xff] %vm1560, %v1160
        %1684 = vst.msk [vmem:[%s172 + $0x3d8] sm:$0xff] %vm1560, %v1163
        %1685 = vst.msk [vmem:[%s172 + $0x3e0] sm:$0xff] %vm1560, %v1166
        %1686 = vst.msk [vmem:[%s172 + $0x3e8] sm:$0xff] %vm1560, %v1169
        %1687 = vst.msk [vmem:[%s172 + $0x3f0] sm:$0xff] %vm1560, %v1172
        %1688 = vst.msk [vmem:[%s172 + $0x3f8] sm:$0xff] %vm1560, %v1175
        %1689 = vst.msk [vmem:[%s172 + $0x400] sm:$0xff] %vm1560, %v1178
        %1690 = vst.msk [vmem:[%s172 + $0x408] sm:$0xff] %vm1560, %v1181
        %1691 = vst.msk [vmem:[%s172 + $0x410] sm:$0xff] %vm1560, %v1184
        %1692 = vst.msk [vmem:[%s172 + $0x418] sm:$0xff] %vm1560, %v1187
        %1693 = vst.msk [vmem:[%s172 + $0x420] sm:$0xff] %vm1560, %v1190
        %1694 = vst.msk [vmem:[%s172 + $0x428] sm:$0xff] %vm1560, %v1193
        %1695 = vst.msk [vmem:[%s172 + $0x430] sm:$0xff] %vm1560, %v1196
        %1696 = vst.msk [vmem:[%s172 + $0x438] sm:$0xff] %vm1560, %v1199
        %1697 = vst.msk [vmem:[%s172 + $0x440] sm:$0xff] %vm1560, %v1202
        %1698 = vst.msk [vmem:[%s172 + $0x448] sm:$0xff] %vm1560, %v1205
        %1699 = vst.msk [vmem:[%s172 + $0x450] sm:$0xff] %vm1560, %v1208
        %1700 = vst.msk [vmem:[%s172 + $0x458] sm:$0xff] %vm1560, %v1211
        %1701 = vst.msk [vmem:[%s172 + $0x460] sm:$0xff] %vm1560, %v1214
        %1702 = vst.msk [vmem:[%s172 + $0x468] sm:$0xff] %vm1560, %v1217
        %1703 = vst.msk [vmem:[%s172 + $0x470] sm:$0xff] %vm1560, %v1220
        %1704 = vst.msk [vmem:[%s172 + $0x478] sm:$0xff] %vm1560, %v1223
        %1705 = vst.msk [vmem:[%s172 + $0x480] sm:$0xff] %vm1560, %v1226
        %1706 = vst.msk [vmem:[%s172 + $0x488] sm:$0xff] %vm1560, %v1229
        %1707 = vst.msk [vmem:[%s172 + $0x490] sm:$0xff] %vm1560, %v1232
        %1708 = vst.msk [vmem:[%s172 + $0x498] sm:$0xff] %vm1560, %v1235
        %1709 = vst.msk [vmem:[%s172 + $0x4a0] sm:$0xff] %vm1560, %v1238
        %1710 = vst.msk [vmem:[%s172 + $0x4a8] sm:$0xff] %vm1560, %v1241
        %1711 = vst.msk [vmem:[%s172 + $0x4b0] sm:$0xff] %vm1560, %v1244
        %1712 = vst.msk [vmem:[%s172 + $0x4b8] sm:$0xff] %vm1560, %v1247
        %1713 = vst.msk [vmem:[%s172 + $0x4c0] sm:$0xff] %vm1560, %v1250
        %1714 = vst.msk [vmem:[%s172 + $0x4c8] sm:$0xff] %vm1560, %v1253
        %1715 = vst.msk [vmem:[%s172 + $0x4d0] sm:$0xff] %vm1560, %v1256
        %1716 = vst.msk [vmem:[%s172 + $0x4d8] sm:$0xff] %vm1560, %v1259
        %1717 = vst.msk [vmem:[%s172 + $0x4e0] sm:$0xff] %vm1560, %v1262
        %1718 = vst.msk [vmem:[%s172 + $0x4e8] sm:$0xff] %vm1560, %v1265
        %1719 = vst.msk [vmem:[%s172 + $0x4f0] sm:$0xff] %vm1560, %v1268
        %1720 = vst.msk [vmem:[%s172 + $0x4f8] sm:$0xff] %vm1560, %v1271
        %1721 = vst.msk [vmem:[%s172 + $0x500] sm:$0xff] %vm1560, %v1274
        %1722 = vst.msk [vmem:[%s172 + $0x508] sm:$0xff] %vm1560, %v1277
        %1723 = vst.msk [vmem:[%s172 + $0x510] sm:$0xff] %vm1560, %v1280
        %1724 = vst.msk [vmem:[%s172 + $0x518] sm:$0xff] %vm1560, %v1283
        %1725 = vst.msk [vmem:[%s172 + $0x520] sm:$0xff] %vm1560, %v1286
        %1726 = vst.msk [vmem:[%s172 + $0x528] sm:$0xff] %vm1560, %v1289
        %1727 = vst.msk [vmem:[%s172 + $0x530] sm:$0xff] %vm1560, %v1292
        %1728 = vst.msk [vmem:[%s172 + $0x538] sm:$0xff] %vm1560, %v1295
        %1729 = vst.msk [vmem:[%s172 + $0x540] sm:$0xff] %vm1560, %v1298
        %1730 = vst.msk [vmem:[%s172 + $0x548] sm:$0xff] %vm1560, %v1301
        %1731 = vst.msk [vmem:[%s172 + $0x550] sm:$0xff] %vm1560, %v1304
        %1732 = vst.msk [vmem:[%s172 + $0x558] sm:$0xff] %vm1560, %v1307
        %1733 = vst.msk [vmem:[%s172 + $0x560] sm:$0xff] %vm1560, %v1310
        %1734 = vst.msk [vmem:[%s172 + $0x568] sm:$0xff] %vm1560, %v1313
        %1735 = vst.msk [vmem:[%s172 + $0x570] sm:$0xff] %vm1560, %v1316
        %1736 = vst.msk [vmem:[%s172 + $0x578] sm:$0xff] %vm1560, %v1319
        %1737 = vst.msk [vmem:[%s172 + $0x580] sm:$0xff] %vm1560, %v1322
        %1738 = vst.msk [vmem:[%s172 + $0x588] sm:$0xff] %vm1560, %v1325
        %1739 = vst.msk [vmem:[%s172 + $0x590] sm:$0xff] %vm1560, %v1328
        %1740 = vst.msk [vmem:[%s172 + $0x598] sm:$0xff] %vm1560, %v1331
        %1741 = vst.msk [vmem:[%s172 + $0x5a0] sm:$0xff] %vm1560, %v1334
        %1742 = vst.msk [vmem:[%s172 + $0x5a8] sm:$0xff] %vm1560, %v1337
        %1743 = vst.msk [vmem:[%s172 + $0x5b0] sm:$0xff] %vm1560, %v1340
        %1744 = vst.msk [vmem:[%s172 + $0x5b8] sm:$0xff] %vm1560, %v1343
        %1745 = vst.msk [vmem:[%s172 + $0x5c0] sm:$0xff] %vm1560, %v1346
        %1746 = vst.msk [vmem:[%s172 + $0x5c8] sm:$0xff] %vm1560, %v1349
        %1747 = vst.msk [vmem:[%s172 + $0x5d0] sm:$0xff] %vm1560, %v1352
        %1748 = vst.msk [vmem:[%s172 + $0x5d8] sm:$0xff] %vm1560, %v1355
        %1749 = vst.msk [vmem:[%s172 + $0x5e0] sm:$0xff] %vm1560, %v1358
        %1750 = vst.msk [vmem:[%s172 + $0x5e8] sm:$0xff] %vm1560, %v1361
        %1751 = vst.msk [vmem:[%s172 + $0x5f0] sm:$0xff] %vm1560, %v1364
        %1752 = vst.msk [vmem:[%s172 + $0x5f8] sm:$0xff] %vm1560, %v1367
        %1753 = vst.msk [vmem:[%s172 + $0x600] sm:$0xff] %vm1560, %v1370
        %1754 = vst.msk [vmem:[%s172 + $0x608] sm:$0xff] %vm1560, %v1373
        %1755 = vst.msk [vmem:[%s172 + $0x610] sm:$0xff] %vm1560, %v1376
        %1756 = vst.msk [vmem:[%s172 + $0x618] sm:$0xff] %vm1560, %v1379
        %1757 = vst.msk [vmem:[%s172 + $0x620] sm:$0xff] %vm1560, %v1382
        %1758 = vst.msk [vmem:[%s172 + $0x628] sm:$0xff] %vm1560, %v1385
        %1759 = vst.msk [vmem:[%s172 + $0x630] sm:$0xff] %vm1560, %v1388
        %1760 = vst.msk [vmem:[%s172 + $0x638] sm:$0xff] %vm1560, %v1391
        %1761 = vst.msk [vmem:[%s172 + $0x640] sm:$0xff] %vm1560, %v1394
        %1762 = vst.msk [vmem:[%s172 + $0x648] sm:$0xff] %vm1560, %v1397
        %1763 = vst.msk [vmem:[%s172 + $0x650] sm:$0xff] %vm1560, %v1400
        %1764 = vst.msk [vmem:[%s172 + $0x658] sm:$0xff] %vm1560, %v1403
        %1765 = vst.msk [vmem:[%s172 + $0x660] sm:$0xff] %vm1560, %v1406
        %1766 = vst.msk [vmem:[%s172 + $0x668] sm:$0xff] %vm1560, %v1409
        %1767 = vst.msk [vmem:[%s172 + $0x670] sm:$0xff] %vm1560, %v1412
        %1768 = vst.msk [vmem:[%s172 + $0x678] sm:$0xff] %vm1560, %v1415
        %1769 = vst.msk [vmem:[%s172 + $0x680] sm:$0xff] %vm1560, %v1418
        %1770 = vst.msk [vmem:[%s172 + $0x688] sm:$0xff] %vm1560, %v1421
        %1771 = vst.msk [vmem:[%s172 + $0x690] sm:$0xff] %vm1560, %v1424
        %1772 = vst.msk [vmem:[%s172 + $0x698] sm:$0xff] %vm1560, %v1427
        %1773 = vst.msk [vmem:[%s172 + $0x6a0] sm:$0xff] %vm1560, %v1430
        %1774 = vst.msk [vmem:[%s172 + $0x6a8] sm:$0xff] %vm1560, %v1433
        %1775 = vst.msk [vmem:[%s172 + $0x6b0] sm:$0xff] %vm1560, %v1436
        %1776 = vst.msk [vmem:[%s172 + $0x6b8] sm:$0xff] %vm1560, %v1439
        %1777 = vst.msk [vmem:[%s172 + $0x6c0] sm:$0xff] %vm1560, %v1442
        %1778 = vst.msk [vmem:[%s172 + $0x6c8] sm:$0xff] %vm1560, %v1445
        %1779 = vst.msk [vmem:[%s172 + $0x6d0] sm:$0xff] %vm1560, %v1448
        %1780 = vst.msk [vmem:[%s172 + $0x6d8] sm:$0xff] %vm1560, %v1451
        %1781 = vst.msk [vmem:[%s172 + $0x6e0] sm:$0xff] %vm1560, %v1454
        %1782 = vst.msk [vmem:[%s172 + $0x6e8] sm:$0xff] %vm1560, %v1457
        %1783 = vst.msk [vmem:[%s172 + $0x6f0] sm:$0xff] %vm1560, %v1460
        %1784 = vst.msk [vmem:[%s172 + $0x6f8] sm:$0xff] %vm1560, %v1463
        %1785 = vst.msk [vmem:[%s172 + $0x700] sm:$0xff] %vm1560, %v1466
        %1786 = vst.msk [vmem:[%s172 + $0x708] sm:$0xff] %vm1560, %v1469
        %1787 = vst.msk [vmem:[%s172 + $0x710] sm:$0xff] %vm1560, %v1472
        %1788 = vst.msk [vmem:[%s172 + $0x718] sm:$0xff] %vm1560, %v1475
        %1789 = vst.msk [vmem:[%s172 + $0x720] sm:$0xff] %vm1560, %v1478
        %1790 = vst.msk [vmem:[%s172 + $0x728] sm:$0xff] %vm1560, %v1481
        %1791 = vst.msk [vmem:[%s172 + $0x730] sm:$0xff] %vm1560, %v1484
        %1792 = vst.msk [vmem:[%s172 + $0x738] sm:$0xff] %vm1560, %v1487
        %1793 = vst.msk [vmem:[%s172 + $0x740] sm:$0xff] %vm1560, %v1490
        %1794 = vst.msk [vmem:[%s172 + $0x748] sm:$0xff] %vm1560, %v1493
        %1795 = vst.msk [vmem:[%s172 + $0x750] sm:$0xff] %vm1560, %v1496
        %1796 = vst.msk [vmem:[%s172 + $0x758] sm:$0xff] %vm1560, %v1499
        %1797 = vst.msk [vmem:[%s172 + $0x760] sm:$0xff] %vm1560, %v1502
        %1798 = vst.msk [vmem:[%s172 + $0x768] sm:$0xff] %vm1560, %v1505
        %1799 = vst.msk [vmem:[%s172 + $0x770] sm:$0xff] %vm1560, %v1508
        %1800 = vst.msk [vmem:[%s172 + $0x778] sm:$0xff] %vm1560, %v1511
        %1801 = vst.msk [vmem:[%s172 + $0x780] sm:$0xff] %vm1560, %v1514
        %1802 = vst.msk [vmem:[%s172 + $0x788] sm:$0xff] %vm1560, %v1517
        %1803 = vst.msk [vmem:[%s172 + $0x790] sm:$0xff] %vm1560, %v1520
        %1804 = vst.msk [vmem:[%s172 + $0x798] sm:$0xff] %vm1560, %v1523
        %1805 = vst.msk [vmem:[%s172 + $0x7a0] sm:$0xff] %vm1560, %v1526
        %1806 = vst.msk [vmem:[%s172 + $0x7a8] sm:$0xff] %vm1560, %v1529
        %1807 = vst.msk [vmem:[%s172 + $0x7b0] sm:$0xff] %vm1560, %v1532
        %1808 = vst.msk [vmem:[%s172 + $0x7b8] sm:$0xff] %vm1560, %v1535
        %1809 = vst.msk [vmem:[%s172 + $0x7c0] sm:$0xff] %vm1560, %v1538
        %1810 = vst.msk [vmem:[%s172 + $0x7c8] sm:$0xff] %vm1560, %v1541
        %1811 = vst.msk [vmem:[%s172 + $0x7d0] sm:$0xff] %vm1560, %v1544
        %1812 = vst.msk [vmem:[%s172 + $0x7d8] sm:$0xff] %vm1560, %v1547
        %1813 = vst.msk [vmem:[%s172 + $0x7e0] sm:$0xff] %vm1560, %v1550
        %1814 = vst.msk [vmem:[%s172 + $0x7e8] sm:$0xff] %vm1560, %v1553
        %1815 = vst.msk [vmem:[%s172 + $0x7f0] sm:$0xff] %vm1560, %v1556
        %1816 = vst.msk [vmem:[%s172 + $0x7f8] sm:$0xff] %vm1560, %v1559
        %s1817 = sand.u32 %s90, 1
        %s1818 = sand.u32 %s90, 1
        %s1819 = smul.addr %s1818, 2048
        %s1820 = scalar_lea.vmem [#allocation2], %s1819
        // Predicated region
        $region33: #{fcn_2_layers_forward.1} parent=31 // pred_check
          %p1821 = pneg %p100
        $region34: #{fcn_2_layers_forward.1} parent=31 // pred_check_branch
          %1823 = sbr.rel (%p1821) target = $region36
        $region35: #{fcn_2_layers_forward.1} parent=31 // pred_region
          %s1824 = smul.u32 256, %s14
          %s1825 = ssub.s32 500, %s1824
          %p1826 = scmp.lt.s32.totalorder %s1825, 256
          %s1827 = scalar_select %p1826, %s1825, 256
          %s1828 = smul.u32 128, %s1827
          %p1829 = scmp.ne.s32.totalorder 0, %s1828
          %s1830 = smul.addr %s1824, 8
          %s1831 = scalar_lea.vmem %s3, %s1830
          // Predicated region
          $region37: #{fcn_2_layers_forward.1} parent=35 // pred_check
            %p1832 = pneg %p1829
          $region38: #{fcn_2_layers_forward.1} parent=35 // pred_check_branch
            %1834 = sbr.rel (%p1832) target = $region40
          $region39: #{fcn_2_layers_forward.1} parent=35 // pred_region
            // Predicated region
            $region41: #{fcn_2_layers_forward.1} parent=39 // pred_check
              _
            $region42: #{fcn_2_layers_forward.1} parent=39 // pred_check_branch
              %1836 = sbr.rel (0) target = $region44
            $region43: #{fcn_2_layers_forward.1} parent=39 // pred_region
              // Predicated region
              $region63: #{fcn_2_layers_forward.1} parent=43 // pred_check
                _
              $region64: #{fcn_2_layers_forward.1} parent=43 // pred_check_branch
                %2012 = sbr.rel (0) target = $region66
              $region65: #{fcn_2_layers_forward.1} parent=43 // pred_region
                %s2013 = sshrl.u32 %s1827, 6
                // While loop
                $region67: #{fcn_2_layers_forward.1} parent=65 // loop_pre_header
                  _
                $region68: #{fcn_2_layers_forward.1} parent=65 // loop_header
                  %s2015 = sphi 0, %s2017
                  %p2016 = scmp.ge.s32.totalorder %s2015, %s2013
                  %s2020 = sphi 0, %s2153
                  %s2021 = sphi %s1820, %s2156
                  %s2022 = sphi %s1831, %s2157
                $region69: #{fcn_2_layers_forward.1} parent=65 // loop_header_branch
                  %2019 = sbr.rel (%p2016) target = $region73
                $region70: #{fcn_2_layers_forward.1} parent=65 // loop_body
                  %v2023 = vld [vmem:[%s2021] sm:$0xff]
                  %2024 = vst [vmem:[%s2022] sm:$0xff] %v2023
                  %v2025 = vld [vmem:[%s2021 + $0x8] sm:$0xff]
                  %2026 = vst [vmem:[%s2022 + $0x8] sm:$0xff] %v2025
                  %v2027 = vld [vmem:[%s2021 + $0x10] sm:$0xff]
                  %2028 = vst [vmem:[%s2022 + $0x10] sm:$0xff] %v2027
                  %v2029 = vld [vmem:[%s2021 + $0x18] sm:$0xff]
                  %2030 = vst [vmem:[%s2022 + $0x18] sm:$0xff] %v2029
                  %v2031 = vld [vmem:[%s2021 + $0x20] sm:$0xff]
                  %2032 = vst [vmem:[%s2022 + $0x20] sm:$0xff] %v2031
                  %v2033 = vld [vmem:[%s2021 + $0x28] sm:$0xff]
                  %2034 = vst [vmem:[%s2022 + $0x28] sm:$0xff] %v2033
                  %v2035 = vld [vmem:[%s2021 + $0x30] sm:$0xff]
                  %2036 = vst [vmem:[%s2022 + $0x30] sm:$0xff] %v2035
                  %v2037 = vld [vmem:[%s2021 + $0x38] sm:$0xff]
                  %2038 = vst [vmem:[%s2022 + $0x38] sm:$0xff] %v2037
                  %v2039 = vld [vmem:[%s2021 + $0x40] sm:$0xff]
                  %2040 = vst [vmem:[%s2022 + $0x40] sm:$0xff] %v2039
                  %v2041 = vld [vmem:[%s2021 + $0x48] sm:$0xff]
                  %2042 = vst [vmem:[%s2022 + $0x48] sm:$0xff] %v2041
                  %v2043 = vld [vmem:[%s2021 + $0x50] sm:$0xff]
                  %2044 = vst [vmem:[%s2022 + $0x50] sm:$0xff] %v2043
                  %v2045 = vld [vmem:[%s2021 + $0x58] sm:$0xff]
                  %2046 = vst [vmem:[%s2022 + $0x58] sm:$0xff] %v2045
                  %v2047 = vld [vmem:[%s2021 + $0x60] sm:$0xff]
                  %2048 = vst [vmem:[%s2022 + $0x60] sm:$0xff] %v2047
                  %v2049 = vld [vmem:[%s2021 + $0x68] sm:$0xff]
                  %2050 = vst [vmem:[%s2022 + $0x68] sm:$0xff] %v2049
                  %v2051 = vld [vmem:[%s2021 + $0x70] sm:$0xff]
                  %2052 = vst [vmem:[%s2022 + $0x70] sm:$0xff] %v2051
                  %v2053 = vld [vmem:[%s2021 + $0x78] sm:$0xff]
                  %2054 = vst [vmem:[%s2022 + $0x78] sm:$0xff] %v2053
                  %v2055 = vld [vmem:[%s2021 + $0x80] sm:$0xff]
                  %2056 = vst [vmem:[%s2022 + $0x80] sm:$0xff] %v2055
                  %v2057 = vld [vmem:[%s2021 + $0x88] sm:$0xff]
                  %2058 = vst [vmem:[%s2022 + $0x88] sm:$0xff] %v2057
                  %v2059 = vld [vmem:[%s2021 + $0x90] sm:$0xff]
                  %2060 = vst [vmem:[%s2022 + $0x90] sm:$0xff] %v2059
                  %v2061 = vld [vmem:[%s2021 + $0x98] sm:$0xff]
                  %2062 = vst [vmem:[%s2022 + $0x98] sm:$0xff] %v2061
                  %v2063 = vld [vmem:[%s2021 + $0xa0] sm:$0xff]
                  %2064 = vst [vmem:[%s2022 + $0xa0] sm:$0xff] %v2063
                  %v2065 = vld [vmem:[%s2021 + $0xa8] sm:$0xff]
                  %2066 = vst [vmem:[%s2022 + $0xa8] sm:$0xff] %v2065
                  %v2067 = vld [vmem:[%s2021 + $0xb0] sm:$0xff]
                  %2068 = vst [vmem:[%s2022 + $0xb0] sm:$0xff] %v2067
                  %v2069 = vld [vmem:[%s2021 + $0xb8] sm:$0xff]
                  %2070 = vst [vmem:[%s2022 + $0xb8] sm:$0xff] %v2069
                  %v2071 = vld [vmem:[%s2021 + $0xc0] sm:$0xff]
                  %2072 = vst [vmem:[%s2022 + $0xc0] sm:$0xff] %v2071
                  %v2073 = vld [vmem:[%s2021 + $0xc8] sm:$0xff]
                  %2074 = vst [vmem:[%s2022 + $0xc8] sm:$0xff] %v2073
                  %v2075 = vld [vmem:[%s2021 + $0xd0] sm:$0xff]
                  %2076 = vst [vmem:[%s2022 + $0xd0] sm:$0xff] %v2075
                  %v2077 = vld [vmem:[%s2021 + $0xd8] sm:$0xff]
                  %2078 = vst [vmem:[%s2022 + $0xd8] sm:$0xff] %v2077
                  %v2079 = vld [vmem:[%s2021 + $0xe0] sm:$0xff]
                  %2080 = vst [vmem:[%s2022 + $0xe0] sm:$0xff] %v2079
                  %v2081 = vld [vmem:[%s2021 + $0xe8] sm:$0xff]
                  %2082 = vst [vmem:[%s2022 + $0xe8] sm:$0xff] %v2081
                  %v2083 = vld [vmem:[%s2021 + $0xf0] sm:$0xff]
                  %2084 = vst [vmem:[%s2022 + $0xf0] sm:$0xff] %v2083
                  %v2085 = vld [vmem:[%s2021 + $0xf8] sm:$0xff]
                  %2086 = vst [vmem:[%s2022 + $0xf8] sm:$0xff] %v2085
                  %v2087 = vld [vmem:[%s2021 + $0x100] sm:$0xff]
                  %2088 = vst [vmem:[%s2022 + $0x100] sm:$0xff] %v2087
                  %v2089 = vld [vmem:[%s2021 + $0x108] sm:$0xff]
                  %2090 = vst [vmem:[%s2022 + $0x108] sm:$0xff] %v2089
                  %v2091 = vld [vmem:[%s2021 + $0x110] sm:$0xff]
                  %2092 = vst [vmem:[%s2022 + $0x110] sm:$0xff] %v2091
                  %v2093 = vld [vmem:[%s2021 + $0x118] sm:$0xff]
                  %2094 = vst [vmem:[%s2022 + $0x118] sm:$0xff] %v2093
                  %v2095 = vld [vmem:[%s2021 + $0x120] sm:$0xff]
                  %2096 = vst [vmem:[%s2022 + $0x120] sm:$0xff] %v2095
                  %v2097 = vld [vmem:[%s2021 + $0x128] sm:$0xff]
                  %2098 = vst [vmem:[%s2022 + $0x128] sm:$0xff] %v2097
                  %v2099 = vld [vmem:[%s2021 + $0x130] sm:$0xff]
                  %2100 = vst [vmem:[%s2022 + $0x130] sm:$0xff] %v2099
                  %v2101 = vld [vmem:[%s2021 + $0x138] sm:$0xff]
                  %2102 = vst [vmem:[%s2022 + $0x138] sm:$0xff] %v2101
                  %v2103 = vld [vmem:[%s2021 + $0x140] sm:$0xff]
                  %2104 = vst [vmem:[%s2022 + $0x140] sm:$0xff] %v2103
                  %v2105 = vld [vmem:[%s2021 + $0x148] sm:$0xff]
                  %2106 = vst [vmem:[%s2022 + $0x148] sm:$0xff] %v2105
                  %v2107 = vld [vmem:[%s2021 + $0x150] sm:$0xff]
                  %2108 = vst [vmem:[%s2022 + $0x150] sm:$0xff] %v2107
                  %v2109 = vld [vmem:[%s2021 + $0x158] sm:$0xff]
                  %2110 = vst [vmem:[%s2022 + $0x158] sm:$0xff] %v2109
                  %v2111 = vld [vmem:[%s2021 + $0x160] sm:$0xff]
                  %2112 = vst [vmem:[%s2022 + $0x160] sm:$0xff] %v2111
                  %v2113 = vld [vmem:[%s2021 + $0x168] sm:$0xff]
                  %2114 = vst [vmem:[%s2022 + $0x168] sm:$0xff] %v2113
                  %v2115 = vld [vmem:[%s2021 + $0x170] sm:$0xff]
                  %2116 = vst [vmem:[%s2022 + $0x170] sm:$0xff] %v2115
                  %v2117 = vld [vmem:[%s2021 + $0x178] sm:$0xff]
                  %2118 = vst [vmem:[%s2022 + $0x178] sm:$0xff] %v2117
                  %v2119 = vld [vmem:[%s2021 + $0x180] sm:$0xff]
                  %2120 = vst [vmem:[%s2022 + $0x180] sm:$0xff] %v2119
                  %v2121 = vld [vmem:[%s2021 + $0x188] sm:$0xff]
                  %2122 = vst [vmem:[%s2022 + $0x188] sm:$0xff] %v2121
                  %v2123 = vld [vmem:[%s2021 + $0x190] sm:$0xff]
                  %2124 = vst [vmem:[%s2022 + $0x190] sm:$0xff] %v2123
                  %v2125 = vld [vmem:[%s2021 + $0x198] sm:$0xff]
                  %2126 = vst [vmem:[%s2022 + $0x198] sm:$0xff] %v2125
                  %v2127 = vld [vmem:[%s2021 + $0x1a0] sm:$0xff]
                  %2128 = vst [vmem:[%s2022 + $0x1a0] sm:$0xff] %v2127
                  %v2129 = vld [vmem:[%s2021 + $0x1a8] sm:$0xff]
                  %2130 = vst [vmem:[%s2022 + $0x1a8] sm:$0xff] %v2129
                  %v2131 = vld [vmem:[%s2021 + $0x1b0] sm:$0xff]
                  %2132 = vst [vmem:[%s2022 + $0x1b0] sm:$0xff] %v2131
                  %v2133 = vld [vmem:[%s2021 + $0x1b8] sm:$0xff]
                  %2134 = vst [vmem:[%s2022 + $0x1b8] sm:$0xff] %v2133
                  %v2135 = vld [vmem:[%s2021 + $0x1c0] sm:$0xff]
                  %2136 = vst [vmem:[%s2022 + $0x1c0] sm:$0xff] %v2135
                  %v2137 = vld [vmem:[%s2021 + $0x1c8] sm:$0xff]
                  %2138 = vst [vmem:[%s2022 + $0x1c8] sm:$0xff] %v2137
                  %v2139 = vld [vmem:[%s2021 + $0x1d0] sm:$0xff]
                  %2140 = vst [vmem:[%s2022 + $0x1d0] sm:$0xff] %v2139
                  %v2141 = vld [vmem:[%s2021 + $0x1d8] sm:$0xff]
                  %2142 = vst [vmem:[%s2022 + $0x1d8] sm:$0xff] %v2141
                  %v2143 = vld [vmem:[%s2021 + $0x1e0] sm:$0xff]
                  %2144 = vst [vmem:[%s2022 + $0x1e0] sm:$0xff] %v2143
                  %v2145 = vld [vmem:[%s2021 + $0x1e8] sm:$0xff]
                  %2146 = vst [vmem:[%s2022 + $0x1e8] sm:$0xff] %v2145
                  %v2147 = vld [vmem:[%s2021 + $0x1f0] sm:$0xff]
                  %2148 = vst [vmem:[%s2022 + $0x1f0] sm:$0xff] %v2147
                  %v2149 = vld [vmem:[%s2021 + $0x1f8] sm:$0xff]
                  %2150 = vst [vmem:[%s2022 + $0x1f8] sm:$0xff] %v2149
                  %s2151 = sadd.s32 1, %s2020
                  %p2152 = scmp.ge.s32.totalorder %s2151, %s2013
                  %s2153 = scalar_select %p2152, 0, %s2151
                  %s2154 = smul.u32 %s2153, 512
                  %s2155 = smul.u32 %s2153, 512
                  %s2156 = scalar_lea.vmem %s1820, %s2154 [#allocation2]
                  %s2157 = scalar_lea.vmem %s1831, %s2155
                $region71: #{fcn_2_layers_forward.1} parent=65 // loop_footer
                  %s2017 = sadd.s32 %s2015, 1
                $region72: #{fcn_2_layers_forward.1} parent=65 // loop_footer_branch
                  %2014 = sbr.rel target = $region68
                $region73: #{fcn_2_layers_forward.1} parent=65 // loop_exit
                  _
                %s2158 = sshrl.u32 %s1827, 6
                %s2159 = sand.u32 %s1827, 63
                %s2160 = smul.u32 %s2158, 64
                %s2161 = smul.u32 8, %s2160
                %s2162 = scalar_lea.vmem %s1820, %s2161 [#allocation2]
                %s2163 = smul.u32 8, %s2160
                %s2164 = scalar_lea.vmem %s1831, %s2163
                // While loop
                $region74: #{fcn_2_layers_forward.1} parent=65 // loop_pre_header
                  _
                $region75: #{fcn_2_layers_forward.1} parent=65 // loop_header
                  %s2166 = sphi 0, %s2168
                  %p2167 = scmp.ge.s32.totalorder %s2166, %s2159
                  %s2171 = sphi 0, %s2178
                  %s2172 = sphi %s2162, %s2181
                  %s2173 = sphi %s2164, %s2182
                $region76: #{fcn_2_layers_forward.1} parent=65 // loop_header_branch
                  %2170 = sbr.rel (%p2167) target = $region80
                $region77: #{fcn_2_layers_forward.1} parent=65 // loop_body
                  %v2174 = vld [vmem:[%s2172] sm:$0xff]
                  %2175 = vst [vmem:[%s2173] sm:$0xff] %v2174
                  %s2176 = sadd.s32 1, %s2171
                  %p2177 = scmp.ge.s32.totalorder %s2176, %s2159
                  %s2178 = scalar_select %p2177, 0, %s2176
                  %s2179 = smul.u32 %s2178, 8
                  %s2180 = smul.u32 %s2178, 8
                  %s2181 = scalar_lea.vmem %s2162, %s2179 [#allocation2]
                  %s2182 = scalar_lea.vmem %s2164, %s2180
                $region78: #{fcn_2_layers_forward.1} parent=65 // loop_footer
                  %s2168 = sadd.s32 %s2166, 1
                $region79: #{fcn_2_layers_forward.1} parent=65 // loop_footer_branch
                  %2165 = sbr.rel target = $region75
                $region80: #{fcn_2_layers_forward.1} parent=65 // loop_exit
                  _
              $region66: #{fcn_2_layers_forward.1} parent=43 // pred_fallthru
                _
              // Predicated region
              $region81: #{fcn_2_layers_forward.1} parent=43 // pred_check
                _
              $region82: #{fcn_2_layers_forward.1} parent=43 // pred_check_branch
                %2184 = sbr.rel target = $region84
              $region83: #{fcn_2_layers_forward.1} parent=43 // pred_region
                _
              $region84: #{fcn_2_layers_forward.1} parent=43 // pred_fallthru
                _
            $region44: #{fcn_2_layers_forward.1} parent=39 // pred_fallthru
              _
            // Predicated region
            $region45: #{fcn_2_layers_forward.1} parent=39 // pred_check
              _
            $region46: #{fcn_2_layers_forward.1} parent=39 // pred_check_branch
              %1838 = sbr.rel target = $region48
            $region47: #{fcn_2_layers_forward.1} parent=39 // pred_region
              %s1840 = ssub.s32 256, 1
              %s1841 = sshrl.u32 %s1827, 6
              // While loop
              $region49: #{fcn_2_layers_forward.1} parent=47 // loop_pre_header
                _
              $region50: #{fcn_2_layers_forward.1} parent=47 // loop_header
                %s1843 = sphi 0, %s1845
                %p1844 = scmp.ge.s32.totalorder %s1843, %s1841
                %s1848 = sphi 0, %s1981
                %s1849 = sphi %s1820, %s1984
                %s1850 = sphi %s1831, %s1985
              $region51: #{fcn_2_layers_forward.1} parent=47 // loop_header_branch
                %1847 = sbr.rel (%p1844) target = $region55
              $region52: #{fcn_2_layers_forward.1} parent=47 // loop_body
                %v1851 = vld [vmem:[%s1849] sm:%s1840]
                %1852 = vst [vmem:[%s1850] sm:%s1840] %v1851
                %v1853 = vld [vmem:[%s1849 + $0x8] sm:%s1840]
                %1854 = vst [vmem:[%s1850 + $0x8] sm:%s1840] %v1853
                %v1855 = vld [vmem:[%s1849 + $0x10] sm:%s1840]
                %1856 = vst [vmem:[%s1850 + $0x10] sm:%s1840] %v1855
                %v1857 = vld [vmem:[%s1849 + $0x18] sm:%s1840]
                %1858 = vst [vmem:[%s1850 + $0x18] sm:%s1840] %v1857
                %v1859 = vld [vmem:[%s1849 + $0x20] sm:%s1840]
                %1860 = vst [vmem:[%s1850 + $0x20] sm:%s1840] %v1859
                %v1861 = vld [vmem:[%s1849 + $0x28] sm:%s1840]
                %1862 = vst [vmem:[%s1850 + $0x28] sm:%s1840] %v1861
                %v1863 = vld [vmem:[%s1849 + $0x30] sm:%s1840]
                %1864 = vst [vmem:[%s1850 + $0x30] sm:%s1840] %v1863
                %v1865 = vld [vmem:[%s1849 + $0x38] sm:%s1840]
                %1866 = vst [vmem:[%s1850 + $0x38] sm:%s1840] %v1865
                %v1867 = vld [vmem:[%s1849 + $0x40] sm:%s1840]
                %1868 = vst [vmem:[%s1850 + $0x40] sm:%s1840] %v1867
                %v1869 = vld [vmem:[%s1849 + $0x48] sm:%s1840]
                %1870 = vst [vmem:[%s1850 + $0x48] sm:%s1840] %v1869
                %v1871 = vld [vmem:[%s1849 + $0x50] sm:%s1840]
                %1872 = vst [vmem:[%s1850 + $0x50] sm:%s1840] %v1871
                %v1873 = vld [vmem:[%s1849 + $0x58] sm:%s1840]
                %1874 = vst [vmem:[%s1850 + $0x58] sm:%s1840] %v1873
                %v1875 = vld [vmem:[%s1849 + $0x60] sm:%s1840]
                %1876 = vst [vmem:[%s1850 + $0x60] sm:%s1840] %v1875
                %v1877 = vld [vmem:[%s1849 + $0x68] sm:%s1840]
                %1878 = vst [vmem:[%s1850 + $0x68] sm:%s1840] %v1877
                %v1879 = vld [vmem:[%s1849 + $0x70] sm:%s1840]
                %1880 = vst [vmem:[%s1850 + $0x70] sm:%s1840] %v1879
                %v1881 = vld [vmem:[%s1849 + $0x78] sm:%s1840]
                %1882 = vst [vmem:[%s1850 + $0x78] sm:%s1840] %v1881
                %v1883 = vld [vmem:[%s1849 + $0x80] sm:%s1840]
                %1884 = vst [vmem:[%s1850 + $0x80] sm:%s1840] %v1883
                %v1885 = vld [vmem:[%s1849 + $0x88] sm:%s1840]
                %1886 = vst [vmem:[%s1850 + $0x88] sm:%s1840] %v1885
                %v1887 = vld [vmem:[%s1849 + $0x90] sm:%s1840]
                %1888 = vst [vmem:[%s1850 + $0x90] sm:%s1840] %v1887
                %v1889 = vld [vmem:[%s1849 + $0x98] sm:%s1840]
                %1890 = vst [vmem:[%s1850 + $0x98] sm:%s1840] %v1889
                %v1891 = vld [vmem:[%s1849 + $0xa0] sm:%s1840]
                %1892 = vst [vmem:[%s1850 + $0xa0] sm:%s1840] %v1891
                %v1893 = vld [vmem:[%s1849 + $0xa8] sm:%s1840]
                %1894 = vst [vmem:[%s1850 + $0xa8] sm:%s1840] %v1893
                %v1895 = vld [vmem:[%s1849 + $0xb0] sm:%s1840]
                %1896 = vst [vmem:[%s1850 + $0xb0] sm:%s1840] %v1895
                %v1897 = vld [vmem:[%s1849 + $0xb8] sm:%s1840]
                %1898 = vst [vmem:[%s1850 + $0xb8] sm:%s1840] %v1897
                %v1899 = vld [vmem:[%s1849 + $0xc0] sm:%s1840]
                %1900 = vst [vmem:[%s1850 + $0xc0] sm:%s1840] %v1899
                %v1901 = vld [vmem:[%s1849 + $0xc8] sm:%s1840]
                %1902 = vst [vmem:[%s1850 + $0xc8] sm:%s1840] %v1901
                %v1903 = vld [vmem:[%s1849 + $0xd0] sm:%s1840]
                %1904 = vst [vmem:[%s1850 + $0xd0] sm:%s1840] %v1903
                %v1905 = vld [vmem:[%s1849 + $0xd8] sm:%s1840]
                %1906 = vst [vmem:[%s1850 + $0xd8] sm:%s1840] %v1905
                %v1907 = vld [vmem:[%s1849 + $0xe0] sm:%s1840]
                %1908 = vst [vmem:[%s1850 + $0xe0] sm:%s1840] %v1907
                %v1909 = vld [vmem:[%s1849 + $0xe8] sm:%s1840]
                %1910 = vst [vmem:[%s1850 + $0xe8] sm:%s1840] %v1909
                %v1911 = vld [vmem:[%s1849 + $0xf0] sm:%s1840]
                %1912 = vst [vmem:[%s1850 + $0xf0] sm:%s1840] %v1911
                %v1913 = vld [vmem:[%s1849 + $0xf8] sm:%s1840]
                %1914 = vst [vmem:[%s1850 + $0xf8] sm:%s1840] %v1913
                %v1915 = vld [vmem:[%s1849 + $0x100] sm:%s1840]
                %1916 = vst [vmem:[%s1850 + $0x100] sm:%s1840] %v1915
                %v1917 = vld [vmem:[%s1849 + $0x108] sm:%s1840]
                %1918 = vst [vmem:[%s1850 + $0x108] sm:%s1840] %v1917
                %v1919 = vld [vmem:[%s1849 + $0x110] sm:%s1840]
                %1920 = vst [vmem:[%s1850 + $0x110] sm:%s1840] %v1919
                %v1921 = vld [vmem:[%s1849 + $0x118] sm:%s1840]
                %1922 = vst [vmem:[%s1850 + $0x118] sm:%s1840] %v1921
                %v1923 = vld [vmem:[%s1849 + $0x120] sm:%s1840]
                %1924 = vst [vmem:[%s1850 + $0x120] sm:%s1840] %v1923
                %v1925 = vld [vmem:[%s1849 + $0x128] sm:%s1840]
                %1926 = vst [vmem:[%s1850 + $0x128] sm:%s1840] %v1925
                %v1927 = vld [vmem:[%s1849 + $0x130] sm:%s1840]
                %1928 = vst [vmem:[%s1850 + $0x130] sm:%s1840] %v1927
                %v1929 = vld [vmem:[%s1849 + $0x138] sm:%s1840]
                %1930 = vst [vmem:[%s1850 + $0x138] sm:%s1840] %v1929
                %v1931 = vld [vmem:[%s1849 + $0x140] sm:%s1840]
                %1932 = vst [vmem:[%s1850 + $0x140] sm:%s1840] %v1931
                %v1933 = vld [vmem:[%s1849 + $0x148] sm:%s1840]
                %1934 = vst [vmem:[%s1850 + $0x148] sm:%s1840] %v1933
                %v1935 = vld [vmem:[%s1849 + $0x150] sm:%s1840]
                %1936 = vst [vmem:[%s1850 + $0x150] sm:%s1840] %v1935
                %v1937 = vld [vmem:[%s1849 + $0x158] sm:%s1840]
                %1938 = vst [vmem:[%s1850 + $0x158] sm:%s1840] %v1937
                %v1939 = vld [vmem:[%s1849 + $0x160] sm:%s1840]
                %1940 = vst [vmem:[%s1850 + $0x160] sm:%s1840] %v1939
                %v1941 = vld [vmem:[%s1849 + $0x168] sm:%s1840]
                %1942 = vst [vmem:[%s1850 + $0x168] sm:%s1840] %v1941
                %v1943 = vld [vmem:[%s1849 + $0x170] sm:%s1840]
                %1944 = vst [vmem:[%s1850 + $0x170] sm:%s1840] %v1943
                %v1945 = vld [vmem:[%s1849 + $0x178] sm:%s1840]
                %1946 = vst [vmem:[%s1850 + $0x178] sm:%s1840] %v1945
                %v1947 = vld [vmem:[%s1849 + $0x180] sm:%s1840]
                %1948 = vst [vmem:[%s1850 + $0x180] sm:%s1840] %v1947
                %v1949 = vld [vmem:[%s1849 + $0x188] sm:%s1840]
                %1950 = vst [vmem:[%s1850 + $0x188] sm:%s1840] %v1949
                %v1951 = vld [vmem:[%s1849 + $0x190] sm:%s1840]
                %1952 = vst [vmem:[%s1850 + $0x190] sm:%s1840] %v1951
                %v1953 = vld [vmem:[%s1849 + $0x198] sm:%s1840]
                %1954 = vst [vmem:[%s1850 + $0x198] sm:%s1840] %v1953
                %v1955 = vld [vmem:[%s1849 + $0x1a0] sm:%s1840]
                %1956 = vst [vmem:[%s1850 + $0x1a0] sm:%s1840] %v1955
                %v1957 = vld [vmem:[%s1849 + $0x1a8] sm:%s1840]
                %1958 = vst [vmem:[%s1850 + $0x1a8] sm:%s1840] %v1957
                %v1959 = vld [vmem:[%s1849 + $0x1b0] sm:%s1840]
                %1960 = vst [vmem:[%s1850 + $0x1b0] sm:%s1840] %v1959
                %v1961 = vld [vmem:[%s1849 + $0x1b8] sm:%s1840]
                %1962 = vst [vmem:[%s1850 + $0x1b8] sm:%s1840] %v1961
                %v1963 = vld [vmem:[%s1849 + $0x1c0] sm:%s1840]
                %1964 = vst [vmem:[%s1850 + $0x1c0] sm:%s1840] %v1963
                %v1965 = vld [vmem:[%s1849 + $0x1c8] sm:%s1840]
                %1966 = vst [vmem:[%s1850 + $0x1c8] sm:%s1840] %v1965
                %v1967 = vld [vmem:[%s1849 + $0x1d0] sm:%s1840]
                %1968 = vst [vmem:[%s1850 + $0x1d0] sm:%s1840] %v1967
                %v1969 = vld [vmem:[%s1849 + $0x1d8] sm:%s1840]
                %1970 = vst [vmem:[%s1850 + $0x1d8] sm:%s1840] %v1969
                %v1971 = vld [vmem:[%s1849 + $0x1e0] sm:%s1840]
                %1972 = vst [vmem:[%s1850 + $0x1e0] sm:%s1840] %v1971
                %v1973 = vld [vmem:[%s1849 + $0x1e8] sm:%s1840]
                %1974 = vst [vmem:[%s1850 + $0x1e8] sm:%s1840] %v1973
                %v1975 = vld [vmem:[%s1849 + $0x1f0] sm:%s1840]
                %1976 = vst [vmem:[%s1850 + $0x1f0] sm:%s1840] %v1975
                %v1977 = vld [vmem:[%s1849 + $0x1f8] sm:%s1840]
                %1978 = vst [vmem:[%s1850 + $0x1f8] sm:%s1840] %v1977
                %s1979 = sadd.s32 1, %s1848
                %p1980 = scmp.ge.s32.totalorder %s1979, %s1841
                %s1981 = scalar_select %p1980, 0, %s1979
                %s1982 = smul.u32 %s1981, 512
                %s1983 = smul.u32 %s1981, 512
                %s1984 = scalar_lea.vmem %s1820, %s1982 [#allocation2]
                %s1985 = scalar_lea.vmem %s1831, %s1983
              $region53: #{fcn_2_layers_forward.1} parent=47 // loop_footer
                %s1845 = sadd.s32 %s1843, 1
              $region54: #{fcn_2_layers_forward.1} parent=47 // loop_footer_branch
                %1842 = sbr.rel target = $region50
              $region55: #{fcn_2_layers_forward.1} parent=47 // loop_exit
                _
              %s1986 = sshrl.u32 %s1827, 6
              %s1987 = sand.u32 %s1827, 63
              %s1988 = smul.u32 %s1986, 64
              %s1989 = smul.u32 8, %s1988
              %s1990 = scalar_lea.vmem %s1820, %s1989 [#allocation2]
              %s1991 = smul.u32 8, %s1988
              %s1992 = scalar_lea.vmem %s1831, %s1991
              // While loop
              $region56: #{fcn_2_layers_forward.1} parent=47 // loop_pre_header
                _
              $region57: #{fcn_2_layers_forward.1} parent=47 // loop_header
                %s1994 = sphi 0, %s1996
                %p1995 = scmp.ge.s32.totalorder %s1994, %s1987
                %s1999 = sphi 0, %s2006
                %s2000 = sphi %s1990, %s2009
                %s2001 = sphi %s1992, %s2010
              $region58: #{fcn_2_layers_forward.1} parent=47 // loop_header_branch
                %1998 = sbr.rel (%p1995) target = $region62
              $region59: #{fcn_2_layers_forward.1} parent=47 // loop_body
                %v2002 = vld [vmem:[%s2000] sm:%s1840]
                %2003 = vst [vmem:[%s2001] sm:%s1840] %v2002
                %s2004 = sadd.s32 1, %s1999
                %p2005 = scmp.ge.s32.totalorder %s2004, %s1987
                %s2006 = scalar_select %p2005, 0, %s2004
                %s2007 = smul.u32 %s2006, 8
                %s2008 = smul.u32 %s2006, 8
                %s2009 = scalar_lea.vmem %s1990, %s2007 [#allocation2]
                %s2010 = scalar_lea.vmem %s1992, %s2008
              $region60: #{fcn_2_layers_forward.1} parent=47 // loop_footer
                %s1996 = sadd.s32 %s1994, 1
              $region61: #{fcn_2_layers_forward.1} parent=47 // loop_footer_branch
                %1993 = sbr.rel target = $region57
              $region62: #{fcn_2_layers_forward.1} parent=47 // loop_exit
                _
            $region48: #{fcn_2_layers_forward.1} parent=39 // pred_fallthru
              _
          $region40: #{fcn_2_layers_forward.1} parent=35 // pred_fallthru
            _
          %2185 = vnop
        $region36: #{fcn_2_layers_forward.1} parent=31 // pred_fallthru
          _
      $region32: #{fcn_2_layers_forward.1} parent=5 // pred_fallthru
        _
      %p2186 = scmp.le.s32.totalorder 2, %s9
      // Predicated region
      $region85: #{fcn_2_layers_forward.1} parent=5 // pred_check
        %p2187 = pneg %p2186
      $region86: #{fcn_2_layers_forward.1} parent=5 // pred_check_branch
        %2189 = sbr.rel (%p2187) target = $region88
      $region87: #{fcn_2_layers_forward.1} parent=5 // pred_region
        %s2190 = ssub.s32 %s9, 2
        // Predicated region
        $region89: #{fcn_2_layers_forward.1} parent=87 // pred_check
          %p2191 = pneg %p106
        $region90: #{fcn_2_layers_forward.1} parent=87 // pred_check_branch
          %2193 = sbr.rel (%p2191) target = $region92
        $region91: #{fcn_2_layers_forward.1} parent=87 // pred_region
          %s2194 = sand.u32 %s91, 1
          %s2195 = sand.u32 %s91, 1
          %s2196 = smul.addr %s2195, 2048
          %s2197 = scalar_lea.vmem [#allocation2], %s2196
        $region92: #{fcn_2_layers_forward.1} parent=87 // pred_fallthru
          _
      $region88: #{fcn_2_layers_forward.1} parent=5 // pred_fallthru
        _
    $region6: #{fcn_2_layers_forward.1} parent=1 // loop_footer
      %s13 = sadd.s32 1, %s9
    $region7: #{fcn_2_layers_forward.1} parent=1 // loop_footer_branch
      %8 = sbr.rel target = $region3
    $region8: #{fcn_2_layers_forward.1} parent=1 // loop_exit
      _

</llo_original>
